<compile_context>
chip_gen: v6e
topology: v6e:2x2x1
jax: 0.10.0
libtpu: 0.0.40
codegen_flags: <defaults>
</compile_context>

<pallas_src>
import math
import functools

import jax
import jax.numpy as jnp
from jax import lax
from jax.experimental import pallas as pl
from jax.experimental.pallas import tpu as pltpu

EPS = 1e-5


def decoder_layer_kernel(x_ref, skv_ref, ckv_ref,
                         qo_w_ref, qo_b_ref,          # [sa_Wq, sa_Wo, ca_Wq, ca_Wo]
                         ln_g_ref, ln_b_ref,          # (3, E) each
                         w1_ref, b1_ref, w2_ref, b2_ref,   # FFN, F pre-chunked
                         o_ref):
    E = x_ref.shape[-1]
    cdt = qo_w_ref.dtype                   # MXU compute dtype
    scale = 1.0 / math.sqrt(E)

    xq = x_ref[0]                          # (tq, E)      query tile, input dtype
    skv = skv_ref[0]                       # (S, 2E)      precomputed self K|V
    ckv = ckv_ref[0]                       # (S_enc, 2E)  precomputed cross K|V

    def layernorm(h, g, b):
        mu = jnp.mean(h, axis=-1, keepdims=True)
        var = jnp.mean(jnp.square(h - mu), axis=-1, keepdims=True)
        return (h - mu) * lax.rsqrt(var + EPS) * g + b

    def attention(q_in, kv, wq, bq, wo, bo):
        # q_in: (tq, E) compute dtype; kv: (S_kv, 2E) compute dtype.
        q = jnp.dot(q_in, wq, preferred_element_type=jnp.float32) + bq
        q = (q * scale).astype(cdt)        # scale E-wide, not S_kv-wide
        k = kv[:, :E]
        v = kv[:, E:]
        # Contract on the last dims directly (no k.T / XLU transpose).
        s = lax.dot_general(q, k, (((1,), (1,)), ((), ())),
                            preferred_element_type=jnp.float32)      # (tq, S_kv)
        # NOTE: for large S / S_enc this should become a k-tiled online softmax.
        s = s - jnp.max(s, axis=-1, keepdims=True)
        p = jnp.exp(s)
        p = p * pl.reciprocal(jnp.sum(p, axis=-1, keepdims=True), approx=True)
        o = jnp.dot(p.astype(cdt), v, preferred_element_type=jnp.float32)
        return jnp.dot(o.astype(cdt), wo, preferred_element_type=jnp.float32) + bo

    # ---- self-attention + add & norm (residual stream kept in f32) ----
    sa = attention(xq.astype(cdt), skv,
                   qo_w_ref[0], qo_b_ref[0], qo_w_ref[1], qo_b_ref[1])
    h = layernorm(xq.astype(jnp.float32) + sa, ln_g_ref[0], ln_b_ref[0])

    # ---- cross-attention + add & norm ----
    ca = attention(h.astype(cdt), ckv,
                   qo_w_ref[2], qo_b_ref[2], qo_w_ref[3], qo_b_ref[3])
    h = layernorm(h + ca, ln_g_ref[1], ln_b_ref[1])

    # ---- feed-forward (hidden dim tiled in nf chunks) + add & norm ----
    h_c = h.astype(cdt)
    nf = w1_ref.shape[0]

    def ff_chunk(j, acc):
        h1 = jnp.dot(h_c, w1_ref[j], preferred_element_type=jnp.float32) + b1_ref[j]
        h1 = jnp.maximum(h1, 0.0)
        return acc + jnp.dot(h1.astype(cdt), w2_ref[j],
                             preferred_element_type=jnp.float32)

    if nf == 1:
        ff = ff_chunk(0, jnp.zeros_like(h))
    else:
        ff = lax.fori_loop(0, nf, ff_chunk, jnp.zeros_like(h), unroll=True)
    ff = ff + b2_ref[0]

    h = layernorm(h + ff, ln_g_ref[2], ln_b_ref[2])
    o_ref[0] = h.astype(o_ref.dtype)


def _vmem_limit_bytes():
    """~75% of physical per-core VMEM: 48 MiB on v7x, 96 MiB on v5e/v6e."""
    try:
        cap = int(pltpu.get_tpu_info().vmem_capacity_bytes)
    except Exception:              # conservative fallback = smallest (v7x) part
        cap = 64 * 1024 * 1024
    return min(cap * 3 // 4, 100 * 1024 * 1024)


@functools.partial(jax.jit, static_argnames=("tq", "compute_dtype"))
def decoder_layer(x, enc_output, params, *, tq=None, compute_dtype=None):
    B, S, E = x.shape
    _, S_enc, _ = enc_output.shape
    F = params["w1"].shape[1]
    cdt = jnp.dtype(compute_dtype) if compute_dtype is not None else x.dtype

    # Query tile: biggest tile <= 256 that divides S, respecting the sublane
    # minimum for the x/out dtype (8 f32 / 16 bf16 / 32 int8|fp8).
    if tq is None:
        min_sub = max(8, 32 // max(x.dtype.itemsize, 1))
        tq = S
        for cand in (256, 128, 64, 32, 16, 8):
            if cand >= min_sub and S % cand == 0:
                tq = cand
                break
    assert S % tq == 0, "sequence length must be divisible by the query tile"

    # ---- precompute K/V once (fused K|V (E,2E) matmuls), outside the kernel ----
    sa_w, sa_b = params["sa_w"], params["sa_b"]
    ca_w, ca_b = params["ca_w"], params["ca_b"]
    sa_kv_w = jnp.concatenate([sa_w[1], sa_w[2]], axis=1)         # (E, 2E)
    sa_kv_b = jnp.concatenate([sa_b[1], sa_b[2]], axis=0)         # (2E,)
    ca_kv_w = jnp.concatenate([ca_w[1], ca_w[2]], axis=1)
    ca_kv_b = jnp.concatenate([ca_b[1], ca_b[2]], axis=0)
    self_kv = (jnp.einsum("bse,ef->bsf", x, sa_kv_w) + sa_kv_b).astype(cdt)
    cross_kv = (jnp.einsum("bse,ef->bsf", enc_output, ca_kv_w) + ca_kv_b).astype(cdt)

    # In-kernel attention weights: only the Q and output projections remain.
    qo_w = jnp.stack([sa_w[0], sa_w[3], ca_w[0], ca_w[3]]).astype(cdt)    # (4, E, E)
    qo_b = jnp.stack([sa_b[0], sa_b[3], ca_b[0], ca_b[3]])                # (4, E)

    # FFN hidden dim pre-chunked so the kernel never materializes (tq, F).
    fc = F
    for cand in (512, 256, 128):
        if F % cand == 0:
            fc = cand
            break
    nf = F // fc
    w1_r = params["w1"].reshape(E, nf, fc).transpose(1, 0, 2).astype(cdt)  # (nf, E, fc)
    b1_r = params["b1"].reshape(nf, fc)                                    # (nf, fc)
    w2_r = params["w2"].reshape(nf, fc, E).astype(cdt)                     # (nf, fc, E)
    b2 = params["b2"]                                                      # (1, E)

    # Grid-invariant blocks: index_map always returns block 0 (fetched once,
    # not re-DMA'd across grid steps since the block index never changes).
    def full(shape):
        return pl.BlockSpec(shape, lambda b, q: (0,) * len(shape))

    operands = (x, self_kv, cross_kv, qo_w, qo_b,
                params["ln_g"], params["ln_b"], w1_r, b1_r, w2_r, b2)

    cost = pl.CostEstimate(
        flops=2 * B * S * E * (4 * E + 2 * F + 2 * S + 2 * S_enc),
        transcendentals=B * S * (S + S_enc),
        bytes_accessed=int(sum(a.size * a.dtype.itemsize for a in operands)
                           + B * S * E * x.dtype.itemsize),
    )

    return pl.pallas_call(
        decoder_layer_kernel,
        out_shape=jax.ShapeDtypeStruct((B, S, E), x.dtype),
        grid_spec=pltpu.PrefetchScalarGridSpec(
            num_scalar_prefetch=0,
            grid=(B, S // tq),
            in_specs=[
                pl.BlockSpec((1, tq, E), lambda b, q: (b, q, 0)),        # x query tile
                pl.BlockSpec((1, S, 2 * E), lambda b, q: (b, 0, 0)),     # self K|V
                pl.BlockSpec((1, S_enc, 2 * E), lambda b, q: (b, 0, 0)), # cross K|V
                full((4, E, E)),       # Wq/Wo (self, cross)
                full((4, E)),          # bq/bo (self, cross)
                full((3, E)),          # layernorm gammas
                full((3, E)),          # layernorm betas
                full((nf, E, fc)),     # ff W1 chunks
                full((nf, fc)),        # ff b1 chunks
                full((nf, fc, E)),     # ff W2 chunks
                full((1, E)),          # ff b2
            ],
            out_specs=pl.BlockSpec((1, tq, E), lambda b, q: (b, q, 0)),
        ),
        compiler_params=pltpu.CompilerParams(
            # Both axes write disjoint output tiles and carry no scratch state,
            # so both stay "parallel" (keeps 2-TC v7x sharding even at B=1/2).
            dimension_semantics=("parallel", "parallel"),
            vmem_limit_bytes=_vmem_limit_bytes(),
        ),
        cost_estimate=cost,
    )(*operands)


def init_params(key, embed_dim, ff_dim, dtype=jnp.float32):
    ks = jax.random.split(key, 8)
    s_e = 1.0 / math.sqrt(embed_dim)
    s_f = 1.0 / math.sqrt(ff_dim)
    return {
        "sa_w": jax.random.uniform(ks[0], (4, embed_dim, embed_dim), dtype, -s_e, s_e),
        "sa_b": jax.random.uniform(ks[1], (4, embed_dim), dtype, -s_e, s_e),
        "ca_w": jax.random.uniform(ks[2], (4, embed_dim, embed_dim), dtype, -s_e, s_e),
        "ca_b": jax.random.uniform(ks[3], (4, embed_dim), dtype, -s_e, s_e),
        "ln_g": jnp.ones((3, embed_dim), dtype),
        "ln_b": jnp.zeros((3, embed_dim), dtype),
        "w1": jax.random.uniform(ks[4], (embed_dim, ff_dim), dtype, -s_e, s_e),
        "b1": jax.random.uniform(ks[5], (1, ff_dim), dtype, -s_e, s_e),
        "w2": jax.random.uniform(ks[6], (ff_dim, embed_dim), dtype, -s_f, s_f),
        "b2": jax.random.uniform(ks[7], (1, embed_dim), dtype, -s_f, s_f),
    }


def reference_decoder_layer(x, enc, params):
    """Pure-JAX reference matching the PyTorch DecoderLayer forward."""
    E = x.shape[-1]
    scale = 1.0 / math.sqrt(E)

    def layernorm(h, g, b):
        mu = jnp.mean(h, axis=-1, keepdims=True)
        var = jnp.mean((h - mu) ** 2, axis=-1, keepdims=True)
        return (h - mu) * lax.rsqrt(var + EPS) * g + b

    def attn(q_in, kv_in, w, b):
        q = jnp.einsum("bse,ef->bsf", q_in, w[0]) + b[0]
        k = jnp.einsum("bse,ef->bsf", kv_in, w[1]) + b[1]
        v = jnp.einsum("bse,ef->bsf", kv_in, w[2]) + b[2]
        s = jnp.einsum("bqe,bke->bqk", q, k) * scale
        p = jax.nn.softmax(s, axis=-1)
        o = jnp.einsum("bqk,bke->bqe", p, v)
        return jnp.einsum("bqe,ef->bqf", o, w[3]) + b[3]

    h = x.astype(jnp.float32)
    enc = enc.astype(jnp.float32)
    pf = jax.tree_util.tree_map(lambda a: a.astype(jnp.float32), params)

    h = layernorm(h + attn(h, h, pf["sa_w"], pf["sa_b"]), pf["ln_g"][0], pf["ln_b"][0])
    h = layernorm(h + attn(h, enc, pf["ca_w"], pf["ca_b"]), pf["ln_g"][1], pf["ln_b"][1])
    ff = jnp.maximum(h @ pf["w1"] + pf["b1"], 0.0) @ pf["w2"] + pf["b2"]
    h = layernorm(h + ff, pf["ln_g"][2], pf["ln_b"][2])
    return h


if __name__ == "__main__":
    # Lane-dense small config: E multiple of 128, S multiple of 8.
    B, S, S_ENC, E, F = 2, 16, 16, 128, 256

    key = jax.random.PRNGKey(0)
    kx, kenc, kp = jax.random.split(key, 3)

    x = jax.random.normal(kx, (B, S, E), jnp.float32)
    enc_output = jax.random.normal(kenc, (B, S_ENC, E), jnp.float32)
    params = init_params(kp, E, F)

    out = decoder_layer(x, enc_output, params, tq=8)   # grid = (2, 2)
    out = jax.block_until_ready(out)

    ref = reference_decoder_layer(x, enc_output, params)
    max_err = float(jnp.max(jnp.abs(out.astype(jnp.float32) - ref)))

    assert out.shape == (B, S, E)
    assert bool(jnp.all(jnp.isfinite(out)))
    assert max_err < 5e-2, f"mismatch vs reference: max abs err {max_err}"
    print("KERNEL_OK")
</pallas_src>

<mosaic_0001>
module attributes {stable_mosaic.version = 11 : i64} {
  func.func @decoder_layer_kernel(%arg0: i32, %arg1: i32, %arg2: memref<1x8x128xf32, #tpu.memory_space<vmem>>, %arg3: memref<1x16x256xf32, #tpu.memory_space<vmem>>, %arg4: memref<1x16x256xf32, #tpu.memory_space<vmem>>, %arg5: memref<4x128x128xf32, #tpu.memory_space<vmem>>, %arg6: memref<4x128xf32, #tpu.memory_space<vmem>>, %arg7: memref<3x128xf32, #tpu.memory_space<vmem>>, %arg8: memref<3x128xf32, #tpu.memory_space<vmem>>, %arg9: memref<1x128x256xf32, #tpu.memory_space<vmem>>, %arg10: memref<1x256xf32, #tpu.memory_space<vmem>>, %arg11: memref<1x256x128xf32, #tpu.memory_space<vmem>>, %arg12: memref<1x128xf32, #tpu.memory_space<vmem>>, %arg13: memref<1x8x128xf32, #tpu.memory_space<vmem>>) attributes {dimension_semantics = [#tpu.dimension_semantics<parallel>, #tpu.dimension_semantics<parallel>], iteration_bounds = array<i64: 2, 2>, scalar_prefetch = 0 : i64, scratch_operands = 0 : i64, tpu.core_type = #tpu.core_type<tc>, window_params = [{transform_indices = @transform_0, window_bounds = array<i64: 1, 8, 128>}, {transform_indices = @transform_1, window_bounds = array<i64: 1, 16, 256>}, {transform_indices = @transform_2, window_bounds = array<i64: 1, 16, 256>}, {pipeline_mode = #tpu.pipeline_mode<synchronous>, transform_indices = @transform_3, window_bounds = array<i64: 4, 128, 128>}, {pipeline_mode = #tpu.pipeline_mode<synchronous>, transform_indices = @transform_4, window_bounds = array<i64: 4, 128>}, {pipeline_mode = #tpu.pipeline_mode<synchronous>, transform_indices = @transform_5, window_bounds = array<i64: 3, 128>}, {pipeline_mode = #tpu.pipeline_mode<synchronous>, transform_indices = @transform_6, window_bounds = array<i64: 3, 128>}, {pipeline_mode = #tpu.pipeline_mode<synchronous>, transform_indices = @transform_7, window_bounds = array<i64: 1, 128, 256>}, {pipeline_mode = #tpu.pipeline_mode<synchronous>, transform_indices = @transform_8, window_bounds = array<i64: 1, 256>}, {pipeline_mode = #tpu.pipeline_mode<synchronous>, transform_indices = @transform_9, window_bounds = array<i64: 1, 256, 128>}, {pipeline_mode = #tpu.pipeline_mode<synchronous>, transform_indices = @transform_10, window_bounds = array<i64: 1, 128>}, {transform_indices = @transform_11, window_bounds = array<i64: 1, 8, 128>}]} {
    %c0 = arith.constant 0 : index
    %c0_0 = arith.constant 0 : index
    %c0_1 = arith.constant 0 : index
    %0 = vector.load %arg2[%c0, %c0_0, %c0_1] : memref<1x8x128xf32, #tpu.memory_space<vmem>>, vector<1x8x128xf32>
    %1 = vector.shape_cast %0 : vector<1x8x128xf32> to vector<8x128xf32>
    %c0_2 = arith.constant 0 : index
    %c0_3 = arith.constant 0 : index
    %c0_4 = arith.constant 0 : index
    %2 = vector.load %arg3[%c0_2, %c0_3, %c0_4] : memref<1x16x256xf32, #tpu.memory_space<vmem>>, vector<1x16x256xf32>
    %3 = vector.shape_cast %2 : vector<1x16x256xf32> to vector<16x256xf32>
    %c0_5 = arith.constant 0 : index
    %c0_6 = arith.constant 0 : index
    %c0_7 = arith.constant 0 : index
    %4 = vector.load %arg4[%c0_5, %c0_6, %c0_7] : memref<1x16x256xf32, #tpu.memory_space<vmem>>, vector<1x16x256xf32>
    %5 = vector.shape_cast %4 : vector<1x16x256xf32> to vector<16x256xf32>
    %c0_8 = arith.constant 0 : index
    %c0_9 = arith.constant 0 : index
    %c0_10 = arith.constant 0 : index
    %6 = vector.load %arg5[%c0_8, %c0_9, %c0_10] : memref<4x128x128xf32, #tpu.memory_space<vmem>>, vector<1x128x128xf32>
    %7 = vector.shape_cast %6 : vector<1x128x128xf32> to vector<128x128xf32>
    %c0_11 = arith.constant 0 : index
    %c0_12 = arith.constant 0 : index
    %8 = vector.load %arg6[%c0_11, %c0_12] : memref<4x128xf32, #tpu.memory_space<vmem>>, vector<1x128xf32>
    %9 = vector.shape_cast %8 : vector<1x128xf32> to vector<128xf32>
    %c1 = arith.constant 1 : index
    %c0_13 = arith.constant 0 : index
    %c0_14 = arith.constant 0 : index
    %10 = vector.load %arg5[%c1, %c0_13, %c0_14] : memref<4x128x128xf32, #tpu.memory_space<vmem>>, vector<1x128x128xf32>
    %11 = vector.shape_cast %10 : vector<1x128x128xf32> to vector<128x128xf32>
    %c1_15 = arith.constant 1 : index
    %c0_16 = arith.constant 0 : index
    %12 = vector.load %arg6[%c1_15, %c0_16] : memref<4x128xf32, #tpu.memory_space<vmem>>, vector<1x128xf32>
    %13 = vector.shape_cast %12 : vector<1x128xf32> to vector<128xf32>
    %cst = arith.constant dense<0.000000e+00> : vector<8x128xf32>
    %14 = tpu.matmul %1, %7, %cst {dimension_numbers = #tpu.dot_dimension_numbers<[1], [0], [0], [1], [0, 0, 1, 1], [], []>} : vector<8x128xf32>, vector<128x128xf32>, vector<8x128xf32> -> vector<8x128xf32>
    %15 = vector.shape_cast %9 : vector<128xf32> to vector<1x128xf32>
    %16 = vector.broadcast %15 : vector<1x128xf32> to vector<8x128xf32>
    %17 = arith.addf %14, %16 : vector<8x128xf32>
    %cst_17 = arith.constant 0.0883883461 : f32
    %18 = vector.broadcast %cst_17 : f32 to vector<8x128xf32>
    %19 = arith.mulf %17, %18 : vector<8x128xf32>
    %20 = vector.extract_strided_slice %3 {offsets = [0, 0], sizes = [16, 128], strides = [1, 1]} : vector<16x256xf32> to vector<16x128xf32>
    %21 = vector.extract_strided_slice %3 {offsets = [0, 128], sizes = [16, 128], strides = [1, 1]} : vector<16x256xf32> to vector<16x128xf32>
    %cst_18 = arith.constant dense<0.000000e+00> : vector<8x16xf32>
    %22 = tpu.matmul %19, %20, %cst_18 {dimension_numbers = #tpu.dot_dimension_numbers<[1], [1], [0], [0], [0, 0, 1, 0], [], []>} : vector<8x128xf32>, vector<16x128xf32>, vector<8x16xf32> -> vector<8x16xf32>
    %cst_19 = arith.constant dense<0xFF800000> : vector<8xf32>
    %23 = vector.multi_reduction <maximumf>, %22, %cst_19 [1] : vector<8x16xf32> to vector<8xf32>
    %24 = vector.shape_cast %23 : vector<8xf32> to vector<8x1xf32>
    %25 = vector.broadcast %24 : vector<8x1xf32> to vector<8x16xf32>
    %26 = arith.subf %22, %25 : vector<8x16xf32>
    %27 = math.exp %26 : vector<8x16xf32>
    %cst_20 = arith.constant dense<0.000000e+00> : vector<8xf32>
    %28 = vector.multi_reduction <add>, %27, %cst_20 [1] : vector<8x16xf32> to vector<8xf32>
    %29 = vector.shape_cast %28 : vector<8xf32> to vector<8x1xf32>
    %30 = tpu.reciprocal %29 {approx = true} : vector<8x1xf32> -> vector<8x1xf32>
    %31 = vector.broadcast %30 : vector<8x1xf32> to vector<8x16xf32>
    %32 = arith.mulf %27, %31 : vector<8x16xf32>
    %cst_21 = arith.constant dense<0.000000e+00> : vector<8x128xf32>
    %33 = tpu.matmul %32, %21, %cst_21 {dimension_numbers = #tpu.dot_dimension_numbers<[1], [0], [0], [1], [0, 0, 1, 1], [], []>} : vector<8x16xf32>, vector<16x128xf32>, vector<8x128xf32> -> vector<8x128xf32>
    %cst_22 = arith.constant dense<0.000000e+00> : vector<8x128xf32>
    %34 = tpu.matmul %33, %11, %cst_22 {dimension_numbers = #tpu.dot_dimension_numbers<[1], [0], [0], [1], [0, 0, 1, 1], [], []>} : vector<8x128xf32>, vector<128x128xf32>, vector<8x128xf32> -> vector<8x128xf32>
    %35 = vector.shape_cast %13 : vector<128xf32> to vector<1x128xf32>
    %36 = vector.broadcast %35 : vector<1x128xf32> to vector<8x128xf32>
    %37 = arith.addf %34, %36 : vector<8x128xf32>
    %38 = arith.addf %1, %37 : vector<8x128xf32>
    %c0_23 = arith.constant 0 : index
    %c0_24 = arith.constant 0 : index
    %39 = vector.load %arg7[%c0_23, %c0_24] : memref<3x128xf32, #tpu.memory_space<vmem>>, vector<1x128xf32>
    %40 = vector.shape_cast %39 : vector<1x128xf32> to vector<128xf32>
    %c0_25 = arith.constant 0 : index
    %c0_26 = arith.constant 0 : index
    %41 = vector.load %arg8[%c0_25, %c0_26] : memref<3x128xf32, #tpu.memory_space<vmem>>, vector<1x128xf32>
    %42 = vector.shape_cast %41 : vector<1x128xf32> to vector<128xf32>
    %cst_27 = arith.constant dense<0.000000e+00> : vector<8xf32>
    %43 = vector.multi_reduction <add>, %38, %cst_27 [1] : vector<8x128xf32> to vector<8xf32>
    %44 = vector.shape_cast %43 : vector<8xf32> to vector<8x1xf32>
    %cst_28 = arith.constant 1.280000e+02 : f32
    %45 = vector.broadcast %cst_28 : f32 to vector<8x1xf32>
    %46 = arith.divf %44, %45 : vector<8x1xf32>
    %47 = vector.broadcast %46 : vector<8x1xf32> to vector<8x128xf32>
    %48 = arith.subf %38, %47 : vector<8x128xf32>
    %49 = arith.mulf %48, %48 : vector<8x128xf32>
    %cst_29 = arith.constant dense<0.000000e+00> : vector<8xf32>
    %50 = vector.multi_reduction <add>, %49, %cst_29 [1] : vector<8x128xf32> to vector<8xf32>
    %51 = vector.shape_cast %50 : vector<8xf32> to vector<8x1xf32>
    %cst_30 = arith.constant 1.280000e+02 : f32
    %52 = vector.broadcast %cst_30 : f32 to vector<8x1xf32>
    %53 = arith.divf %51, %52 : vector<8x1xf32>
    %54 = vector.broadcast %46 : vector<8x1xf32> to vector<8x128xf32>
    %55 = arith.subf %38, %54 : vector<8x128xf32>
    %cst_31 = arith.constant 9.99999974E-6 : f32
    %56 = vector.broadcast %cst_31 : f32 to vector<8x1xf32>
    %57 = arith.addf %53, %56 : vector<8x1xf32>
    %58 = math.rsqrt %57 : vector<8x1xf32>
    %59 = vector.broadcast %58 : vector<8x1xf32> to vector<8x128xf32>
    %60 = arith.mulf %55, %59 : vector<8x128xf32>
    %61 = vector.shape_cast %40 : vector<128xf32> to vector<1x128xf32>
    %62 = vector.broadcast %61 : vector<1x128xf32> to vector<8x128xf32>
    %63 = arith.mulf %60, %62 : vector<8x128xf32>
    %64 = vector.shape_cast %42 : vector<128xf32> to vector<1x128xf32>
    %65 = vector.broadcast %64 : vector<1x128xf32> to vector<8x128xf32>
    %66 = arith.addf %63, %65 : vector<8x128xf32>
    %c2 = arith.constant 2 : index
    %c0_32 = arith.constant 0 : index
    %c0_33 = arith.constant 0 : index
    %67 = vector.load %arg5[%c2, %c0_32, %c0_33] : memref<4x128x128xf32, #tpu.memory_space<vmem>>, vector<1x128x128xf32>
    %68 = vector.shape_cast %67 : vector<1x128x128xf32> to vector<128x128xf32>
    %c2_34 = arith.constant 2 : index
    %c0_35 = arith.constant 0 : index
    %69 = vector.load %arg6[%c2_34, %c0_35] : memref<4x128xf32, #tpu.memory_space<vmem>>, vector<1x128xf32>
    %70 = vector.shape_cast %69 : vector<1x128xf32> to vector<128xf32>
    %c3 = arith.constant 3 : index
    %c0_36 = arith.constant 0 : index
    %c0_37 = arith.constant 0 : index
    %71 = vector.load %arg5[%c3, %c0_36, %c0_37] : memref<4x128x128xf32, #tpu.memory_space<vmem>>, vector<1x128x128xf32>
    %72 = vector.shape_cast %71 : vector<1x128x128xf32> to vector<128x128xf32>
    %c3_38 = arith.constant 3 : index
    %c0_39 = arith.constant 0 : index
    %73 = vector.load %arg6[%c3_38, %c0_39] : memref<4x128xf32, #tpu.memory_space<vmem>>, vector<1x128xf32>
    %74 = vector.shape_cast %73 : vector<1x128xf32> to vector<128xf32>
    %cst_40 = arith.constant dense<0.000000e+00> : vector<8x128xf32>
    %75 = tpu.matmul %66, %68, %cst_40 {dimension_numbers = #tpu.dot_dimension_numbers<[1], [0], [0], [1], [0, 0, 1, 1], [], []>} : vector<8x128xf32>, vector<128x128xf32>, vector<8x128xf32> -> vector<8x128xf32>
    %76 = vector.shape_cast %70 : vector<128xf32> to vector<1x128xf32>
    %77 = vector.broadcast %76 : vector<1x128xf32> to vector<8x128xf32>
    %78 = arith.addf %75, %77 : vector<8x128xf32>
    %cst_41 = arith.constant 0.0883883461 : f32
    %79 = vector.broadcast %cst_41 : f32 to vector<8x128xf32>
    %80 = arith.mulf %78, %79 : vector<8x128xf32>
    %81 = vector.extract_strided_slice %5 {offsets = [0, 0], sizes = [16, 128], strides = [1, 1]} : vector<16x256xf32> to vector<16x128xf32>
    %82 = vector.extract_strided_slice %5 {offsets = [0, 128], sizes = [16, 128], strides = [1, 1]} : vector<16x256xf32> to vector<16x128xf32>
    %cst_42 = arith.constant dense<0.000000e+00> : vector<8x16xf32>
    %83 = tpu.matmul %80, %81, %cst_42 {dimension_numbers = #tpu.dot_dimension_numbers<[1], [1], [0], [0], [0, 0, 1, 0], [], []>} : vector<8x128xf32>, vector<16x128xf32>, vector<8x16xf32> -> vector<8x16xf32>
    %cst_43 = arith.constant dense<0xFF800000> : vector<8xf32>
    %84 = vector.multi_reduction <maximumf>, %83, %cst_43 [1] : vector<8x16xf32> to vector<8xf32>
    %85 = vector.shape_cast %84 : vector<8xf32> to vector<8x1xf32>
    %86 = vector.broadcast %85 : vector<8x1xf32> to vector<8x16xf32>
    %87 = arith.subf %83, %86 : vector<8x16xf32>
    %88 = math.exp %87 : vector<8x16xf32>
    %cst_44 = arith.constant dense<0.000000e+00> : vector<8xf32>
    %89 = vector.multi_reduction <add>, %88, %cst_44 [1] : vector<8x16xf32> to vector<8xf32>
    %90 = vector.shape_cast %89 : vector<8xf32> to vector<8x1xf32>
    %91 = tpu.reciprocal %90 {approx = true} : vector<8x1xf32> -> vector<8x1xf32>
    %92 = vector.broadcast %91 : vector<8x1xf32> to vector<8x16xf32>
    %93 = arith.mulf %88, %92 : vector<8x16xf32>
    %cst_45 = arith.constant dense<0.000000e+00> : vector<8x128xf32>
    %94 = tpu.matmul %93, %82, %cst_45 {dimension_numbers = #tpu.dot_dimension_numbers<[1], [0], [0], [1], [0, 0, 1, 1], [], []>} : vector<8x16xf32>, vector<16x128xf32>, vector<8x128xf32> -> vector<8x128xf32>
    %cst_46 = arith.constant dense<0.000000e+00> : vector<8x128xf32>
    %95 = tpu.matmul %94, %72, %cst_46 {dimension_numbers = #tpu.dot_dimension_numbers<[1], [0], [0], [1], [0, 0, 1, 1], [], []>} : vector<8x128xf32>, vector<128x128xf32>, vector<8x128xf32> -> vector<8x128xf32>
    %96 = vector.shape_cast %74 : vector<128xf32> to vector<1x128xf32>
    %97 = vector.broadcast %96 : vector<1x128xf32> to vector<8x128xf32>
    %98 = arith.addf %95, %97 : vector<8x128xf32>
    %99 = arith.addf %66, %98 : vector<8x128xf32>
    %c1_47 = arith.constant 1 : index
    %c0_48 = arith.constant 0 : index
    %100 = vector.load %arg7[%c1_47, %c0_48] : memref<3x128xf32, #tpu.memory_space<vmem>>, vector<1x128xf32>
    %101 = vector.shape_cast %100 : vector<1x128xf32> to vector<128xf32>
    %c1_49 = arith.constant 1 : index
    %c0_50 = arith.constant 0 : index
    %102 = vector.load %arg8[%c1_49, %c0_50] : memref<3x128xf32, #tpu.memory_space<vmem>>, vector<1x128xf32>
    %103 = vector.shape_cast %102 : vector<1x128xf32> to vector<128xf32>
    %cst_51 = arith.constant dense<0.000000e+00> : vector<8xf32>
    %104 = vector.multi_reduction <add>, %99, %cst_51 [1] : vector<8x128xf32> to vector<8xf32>
    %105 = vector.shape_cast %104 : vector<8xf32> to vector<8x1xf32>
    %cst_52 = arith.constant 1.280000e+02 : f32
    %106 = vector.broadcast %cst_52 : f32 to vector<8x1xf32>
    %107 = arith.divf %105, %106 : vector<8x1xf32>
    %108 = vector.broadcast %107 : vector<8x1xf32> to vector<8x128xf32>
    %109 = arith.subf %99, %108 : vector<8x128xf32>
    %110 = arith.mulf %109, %109 : vector<8x128xf32>
    %cst_53 = arith.constant dense<0.000000e+00> : vector<8xf32>
    %111 = vector.multi_reduction <add>, %110, %cst_53 [1] : vector<8x128xf32> to vector<8xf32>
    %112 = vector.shape_cast %111 : vector<8xf32> to vector<8x1xf32>
    %cst_54 = arith.constant 1.280000e+02 : f32
    %113 = vector.broadcast %cst_54 : f32 to vector<8x1xf32>
    %114 = arith.divf %112, %113 : vector<8x1xf32>
    %115 = vector.broadcast %107 : vector<8x1xf32> to vector<8x128xf32>
    %116 = arith.subf %99, %115 : vector<8x128xf32>
    %cst_55 = arith.constant 9.99999974E-6 : f32
    %117 = vector.broadcast %cst_55 : f32 to vector<8x1xf32>
    %118 = arith.addf %114, %117 : vector<8x1xf32>
    %119 = math.rsqrt %118 : vector<8x1xf32>
    %120 = vector.broadcast %119 : vector<8x1xf32> to vector<8x128xf32>
    %121 = arith.mulf %116, %120 : vector<8x128xf32>
    %122 = vector.shape_cast %101 : vector<128xf32> to vector<1x128xf32>
    %123 = vector.broadcast %122 : vector<1x128xf32> to vector<8x128xf32>
    %124 = arith.mulf %121, %123 : vector<8x128xf32>
    %125 = vector.shape_cast %103 : vector<128xf32> to vector<1x128xf32>
    %126 = vector.broadcast %125 : vector<1x128xf32> to vector<8x128xf32>
    %127 = arith.addf %124, %126 : vector<8x128xf32>
    %cst_56 = arith.constant 0.000000e+00 : f32
    %128 = vector.broadcast %cst_56 : f32 to vector<8x128xf32>
    %c0_57 = arith.constant 0 : index
    %c0_58 = arith.constant 0 : index
    %c0_59 = arith.constant 0 : index
    %129 = vector.load %arg9[%c0_57, %c0_58, %c0_59] : memref<1x128x256xf32, #tpu.memory_space<vmem>>, vector<1x128x256xf32>
    %130 = vector.shape_cast %129 : vector<1x128x256xf32> to vector<128x256xf32>
    %cst_60 = arith.constant dense<0.000000e+00> : vector<8x256xf32>
    %131 = tpu.matmul %127, %130, %cst_60 {dimension_numbers = #tpu.dot_dimension_numbers<[1], [0], [0], [1], [0, 0, 1, 1], [], []>} : vector<8x128xf32>, vector<128x256xf32>, vector<8x256xf32> -> vector<8x256xf32>
    %c0_61 = arith.constant 0 : index
    %c0_62 = arith.constant 0 : index
    %132 = vector.load %arg10[%c0_61, %c0_62] : memref<1x256xf32, #tpu.memory_space<vmem>>, vector<1x256xf32>
    %133 = vector.shape_cast %132 : vector<1x256xf32> to vector<256xf32>
    %134 = vector.shape_cast %133 : vector<256xf32> to vector<1x256xf32>
    %135 = vector.broadcast %134 : vector<1x256xf32> to vector<8x256xf32>
    %136 = arith.addf %131, %135 : vector<8x256xf32>
    %cst_63 = arith.constant 0.000000e+00 : f32
    %137 = vector.broadcast %cst_63 : f32 to vector<8x256xf32>
    %138 = arith.maximumf %136, %137 : vector<8x256xf32>
    %c0_64 = arith.constant 0 : index
    %c0_65 = arith.constant 0 : index
    %c0_66 = arith.constant 0 : index
    %139 = vector.load %arg11[%c0_64, %c0_65, %c0_66] : memref<1x256x128xf32, #tpu.memory_space<vmem>>, vector<1x256x128xf32>
    %140 = vector.shape_cast %139 : vector<1x256x128xf32> to vector<256x128xf32>
    %cst_67 = arith.constant dense<0.000000e+00> : vector<8x128xf32>
    %141 = tpu.matmul %138, %140, %cst_67 {dimension_numbers = #tpu.dot_dimension_numbers<[1], [0], [0], [1], [0, 0, 1, 1], [], []>} : vector<8x256xf32>, vector<256x128xf32>, vector<8x128xf32> -> vector<8x128xf32>
    %142 = arith.addf %128, %141 : vector<8x128xf32>
    %c0_68 = arith.constant 0 : index
    %c0_69 = arith.constant 0 : index
    %143 = vector.load %arg12[%c0_68, %c0_69] : memref<1x128xf32, #tpu.memory_space<vmem>>, vector<1x128xf32>
    %144 = vector.shape_cast %143 : vector<1x128xf32> to vector<128xf32>
    %145 = vector.shape_cast %144 : vector<128xf32> to vector<1x128xf32>
    %146 = vector.broadcast %145 : vector<1x128xf32> to vector<8x128xf32>
    %147 = arith.addf %142, %146 : vector<8x128xf32>
    %148 = arith.addf %127, %147 : vector<8x128xf32>
    %c2_70 = arith.constant 2 : index
    %c0_71 = arith.constant 0 : index
    %149 = vector.load %arg7[%c2_70, %c0_71] : memref<3x128xf32, #tpu.memory_space<vmem>>, vector<1x128xf32>
    %150 = vector.shape_cast %149 : vector<1x128xf32> to vector<128xf32>
    %c2_72 = arith.constant 2 : index
    %c0_73 = arith.constant 0 : index
    %151 = vector.load %arg8[%c2_72, %c0_73] : memref<3x128xf32, #tpu.memory_space<vmem>>, vector<1x128xf32>
    %152 = vector.shape_cast %151 : vector<1x128xf32> to vector<128xf32>
    %cst_74 = arith.constant dense<0.000000e+00> : vector<8xf32>
    %153 = vector.multi_reduction <add>, %148, %cst_74 [1] : vector<8x128xf32> to vector<8xf32>
    %154 = vector.shape_cast %153 : vector<8xf32> to vector<8x1xf32>
    %cst_75 = arith.constant 1.280000e+02 : f32
    %155 = vector.broadcast %cst_75 : f32 to vector<8x1xf32>
    %156 = arith.divf %154, %155 : vector<8x1xf32>
    %157 = vector.broadcast %156 : vector<8x1xf32> to vector<8x128xf32>
    %158 = arith.subf %148, %157 : vector<8x128xf32>
    %159 = arith.mulf %158, %158 : vector<8x128xf32>
    %cst_76 = arith.constant dense<0.000000e+00> : vector<8xf32>
    %160 = vector.multi_reduction <add>, %159, %cst_76 [1] : vector<8x128xf32> to vector<8xf32>
    %161 = vector.shape_cast %160 : vector<8xf32> to vector<8x1xf32>
    %cst_77 = arith.constant 1.280000e+02 : f32
    %162 = vector.broadcast %cst_77 : f32 to vector<8x1xf32>
    %163 = arith.divf %161, %162 : vector<8x1xf32>
    %164 = vector.broadcast %156 : vector<8x1xf32> to vector<8x128xf32>
    %165 = arith.subf %148, %164 : vector<8x128xf32>
    %cst_78 = arith.constant 9.99999974E-6 : f32
    %166 = vector.broadcast %cst_78 : f32 to vector<8x1xf32>
    %167 = arith.addf %163, %166 : vector<8x1xf32>
    %168 = math.rsqrt %167 : vector<8x1xf32>
    %169 = vector.broadcast %168 : vector<8x1xf32> to vector<8x128xf32>
    %170 = arith.mulf %165, %169 : vector<8x128xf32>
    %171 = vector.shape_cast %150 : vector<128xf32> to vector<1x128xf32>
    %172 = vector.broadcast %171 : vector<1x128xf32> to vector<8x128xf32>
    %173 = arith.mulf %170, %172 : vector<8x128xf32>
    %174 = vector.shape_cast %152 : vector<128xf32> to vector<1x128xf32>
    %175 = vector.broadcast %174 : vector<1x128xf32> to vector<8x128xf32>
    %176 = arith.addf %173, %175 : vector<8x128xf32>
    %c0_79 = arith.constant 0 : index
    %c0_80 = arith.constant 0 : index
    %c0_81 = arith.constant 0 : index
    %177 = vector.load %arg13[%c0_79, %c0_80, %c0_81] : memref<1x8x128xf32, #tpu.memory_space<vmem>>, vector<1x8x128xf32>
    %178 = vector.shape_cast %177 : vector<1x8x128xf32> to vector<8x128xf32>
    %179 = vector.shape_cast %176 : vector<8x128xf32> to vector<1x8x128xf32>
    tpu.vector_store %arg13[%c0_79, %c0_80, %c0_81], %179 {strides = array<i32>} : memref<1x8x128xf32, #tpu.memory_space<vmem>>, vector<1x8x128xf32>,
    return
  }
  func.func @transform_0(%arg0: i32, %arg1: i32) -> (i32, i32, i32) {
    %c0_i32 = arith.constant 0 : i32
    %c0_i32_0 = arith.constant 0 : i32
    return %arg0, %arg1, %c0_i32 : i32, i32, i32
  }
  func.func @transform_1(%arg0: i32, %arg1: i32) -> (i32, i32, i32) {
    %c0_i32 = arith.constant 0 : i32
    %c0_i32_0 = arith.constant 0 : i32
    %c0_i32_1 = arith.constant 0 : i32
    return %arg0, %c0_i32, %c0_i32_0 : i32, i32, i32
  }
  func.func @transform_2(%arg0: i32, %arg1: i32) -> (i32, i32, i32) {
    %c0_i32 = arith.constant 0 : i32
    %c0_i32_0 = arith.constant 0 : i32
    %c0_i32_1 = arith.constant 0 : i32
    return %arg0, %c0_i32, %c0_i32_0 : i32, i32, i32
  }
  func.func @transform_3(%arg0: i32, %arg1: i32) -> (i32, i32, i32) {
    %c0_i32 = arith.constant 0 : i32
    %c0_i32_0 = arith.constant 0 : i32
    %c0_i32_1 = arith.constant 0 : i32
    %c0_i32_2 = arith.constant 0 : i32
    return %c0_i32, %c0_i32_0, %c0_i32_1 : i32, i32, i32
  }
  func.func @transform_4(%arg0: i32, %arg1: i32) -> (i32, i32) {
    %c0_i32 = arith.constant 0 : i32
    %c0_i32_0 = arith.constant 0 : i32
    %c0_i32_1 = arith.constant 0 : i32
    return %c0_i32, %c0_i32_0 : i32, i32
  }
  func.func @transform_5(%arg0: i32, %arg1: i32) -> (i32, i32) {
    %c0_i32 = arith.constant 0 : i32
    %c0_i32_0 = arith.constant 0 : i32
    %c0_i32_1 = arith.constant 0 : i32
    return %c0_i32, %c0_i32_0 : i32, i32
  }
  func.func @transform_6(%arg0: i32, %arg1: i32) -> (i32, i32) {
    %c0_i32 = arith.constant 0 : i32
    %c0_i32_0 = arith.constant 0 : i32
    %c0_i32_1 = arith.constant 0 : i32
    return %c0_i32, %c0_i32_0 : i32, i32
  }
  func.func @transform_7(%arg0: i32, %arg1: i32) -> (i32, i32, i32) {
    %c0_i32 = arith.constant 0 : i32
    %c0_i32_0 = arith.constant 0 : i32
    %c0_i32_1 = arith.constant 0 : i32
    %c0_i32_2 = arith.constant 0 : i32
    return %c0_i32, %c0_i32_0, %c0_i32_1 : i32, i32, i32
  }
  func.func @transform_8(%arg0: i32, %arg1: i32) -> (i32, i32) {
    %c0_i32 = arith.constant 0 : i32
    %c0_i32_0 = arith.constant 0 : i32
    %c0_i32_1 = arith.constant 0 : i32
    return %c0_i32, %c0_i32_0 : i32, i32
  }
  func.func @transform_9(%arg0: i32, %arg1: i32) -> (i32, i32, i32) {
    %c0_i32 = arith.constant 0 : i32
    %c0_i32_0 = arith.constant 0 : i32
    %c0_i32_1 = arith.constant 0 : i32
    %c0_i32_2 = arith.constant 0 : i32
    return %c0_i32, %c0_i32_0, %c0_i32_1 : i32, i32, i32
  }
  func.func @transform_10(%arg0: i32, %arg1: i32) -> (i32, i32) {
    %c0_i32 = arith.constant 0 : i32
    %c0_i32_0 = arith.constant 0 : i32
    %c0_i32_1 = arith.constant 0 : i32
    return %c0_i32, %c0_i32_0 : i32, i32
  }
  func.func @transform_11(%arg0: i32, %arg1: i32) -> (i32, i32, i32) {
    %c0_i32 = arith.constant 0 : i32
    %c0_i32_0 = arith.constant 0 : i32
    return %arg0, %arg1, %c0_i32 : i32, i32, i32
  }
}

</mosaic_0001>

<llo_original>
// kernel: decoder_layer.1
$region0: #{decoder_layer.1}
  #allocation0 [shape = 'u32[]', space=smem, size = 0x4, offset = 0x4, fixed_abs, tag = 'smem constant byte address 0x4 - core index']
  #allocation1 [shape = 'u32[144,128]{1,0:T(1,128)}', space=vmem, size = 0x12000, scoped, tag = 'internal scratch']
  %s0 = inlined_call_operand.vmem [shape: f32[2,16,128], index: 0, kind: input, shape index: {}]
  %s1 = inlined_call_operand.vmem [shape: f32[2,16,256], index: 1, kind: input, shape index: {}]
  %s2 = inlined_call_operand.vmem [shape: f32[2,16,256], index: 2, kind: input, shape index: {}]
  %s3 = inlined_call_operand.vmem [shape: f32[4,128,128], index: 3, kind: input, shape index: {}]
  %s4 = inlined_call_operand.vmem [shape: f32[4,128], index: 4, kind: input, shape index: {}]
  %s5 = inlined_call_operand.vmem [shape: f32[3,128], index: 5, kind: input, shape index: {}]
  %s6 = inlined_call_operand.vmem [shape: f32[3,128], index: 6, kind: input, shape index: {}]
  %s7 = inlined_call_operand.vmem [shape: f32[1,128,256], index: 7, kind: input, shape index: {}]
  %s8 = inlined_call_operand.vmem [shape: f32[1,256], index: 8, kind: input, shape index: {}]
  %s9 = inlined_call_operand.vmem [shape: f32[1,256,128], index: 9, kind: input, shape index: {}]
  %s10 = inlined_call_operand.vmem [shape: f32[1,128], index: 10, kind: input, shape index: {}]
  %s11 = inlined_call_operand.hbm [shape: f32[2,16,128], index: 11, kind: output, shape index: {}]
  %s12 = sld [smem:[#allocation0]]
  $region77: #{decoder_layer.1} parent=0
    _
  %s14 = ssub.s32 1, %s12
  %s15 = scalar_select 0, %s14, %s12
  $region1: #{decoder_layer.1} parent=0
    #allocation2 [shape = 'u8[8192]{0}', space=vmem, size = 0x2000, scoped, tag = 'output window, operand 0']
    #allocation3 [shape = 's32[2]{0}', space=sflag, size = 0x8, scoped, tag = 'scoped memory for decoder_layer.1']
    %16 = vsyncpa [#allocation3], 0
    %s17 = scalar_lea.sflag [#allocation3], 1
    %18 = vsyncpa %s17, 0
    loop: start=0, step=1, limit=6
    $region2: #{decoder_layer.1} parent=1 // loop_pre_header
      _
    $region3: #{decoder_layer.1} parent=1 // loop_header
      %s20 = sphi 0, %s24
      %p21 = scmp.ge.s32.totalorder %s20, 6
      %s27 = sphi 0, %s39
      %s28 = sphi 0, %s35
      %s29 = sphi 0, %s27
      %s30 = sphi 0, %s28
      %s31 = sphi 0, %s29
      %s32 = sphi 0, %s30
      %s44 = sphi 0, %s46
      %s47 = sphi 0, %s44
      %s48 = sphi 0, %s47
      %s64 = sphi 0, %s48
      %s70 = sphi 0, %s72
      %s73 = sphi 0, %s70
      %s74 = sphi 0, %s73
      %s90 = sphi 0, %s74
      %s96 = sphi 0, %s98
      %s99 = sphi 0, %s96
      %s100 = sphi 0, %s99
      %s116 = sphi 0, %s100
      %s120 = sphi 0, %s120
      %s122 = sphi 0, %s120
      %s123 = sphi 0, %s122
      %s137 = sphi 0, %s123
      %s141 = sphi 0, %s141
      %s143 = sphi 0, %s141
      %s144 = sphi 0, %s143
      %s158 = sphi 0, %s144
      %s162 = sphi 0, %s162
      %s164 = sphi 0, %s162
      %s165 = sphi 0, %s164
      %s179 = sphi 0, %s165
      %s183 = sphi 0, %s183
      %s185 = sphi 0, %s183
      %s186 = sphi 0, %s185
      %s200 = sphi 0, %s186
      %s204 = sphi 0, %s204
      %s206 = sphi 0, %s204
      %s207 = sphi 0, %s206
      %s221 = sphi 0, %s207
      %s225 = sphi 0, %s225
      %s227 = sphi 0, %s225
      %s228 = sphi 0, %s227
      %s242 = sphi 0, %s228
      %s246 = sphi 0, %s246
      %s248 = sphi 0, %s246
      %s249 = sphi 0, %s248
      %s263 = sphi 0, %s249
      %s267 = sphi 0, %s267
      %s269 = sphi 0, %s267
      %s270 = sphi 0, %s269
      %s284 = sphi 0, %s270
      %s292 = sphi 0, %s294
      %s295 = sphi 0, %s292
      %s296 = sphi 0, %s295
      %s312 = sphi 0, %s296
    $region4: #{decoder_layer.1} parent=1 // loop_header_branch
      %23 = sbr.rel (%p21) target = $region8
    $region5: #{decoder_layer.1} parent=1 // loop_body
      %s25 = ssub.s32 %s20, 1
      %s26 = ssub.s32 %s20, 2
      %s33 = sadd.s32 1, %s28
      %p34 = scmp.ge.s32.totalorder %s33, 2
      %s35 = scalar_select %p34, 0, %s33
      %s36 = sadd.s32 1, %s27
      %s37 = scalar_select %p34, %s36, %s27
      %p38 = scmp.ge.s32.totalorder %s37, 2
      %s39 = scalar_select %p38, 0, %s37
      %s40 = ssub.s32 %s27, %s39
      %s41 = ssub.s32 %s28, %s35
      %s42 = sor.u32 %s40, %s41
      %p43 = scmp.eq.s32.totalorder %s42, 0
      %s45 = sadd.s32 %s44, 1
      %s46 = scalar_select %p43, %s44, %s45
      %p49 = pneg %p43
      %p50 = scmp.eq.s32.totalorder %s20, 3
      %p51 = por %p49, %p50
      %p52 = scmp.ne.s32.totalorder %s44, %s47
      %p53 = scmp.eq.s32.totalorder %s20, 0
      %p54 = por %p52, %p53
      %p55 = scmp.ne.s32.totalorder %s44, %s47
      %p56 = scmp.eq.s32.totalorder %s25, 3
      %p57 = por %p55, %p56
      %p58 = scmp.ne.s32.totalorder %s47, %s48
      %p59 = scmp.eq.s32.totalorder %s25, 0
      %p60 = por %p58, %p59
      %p61 = scmp.ne.s32.totalorder %s47, %s48
      %p62 = scmp.eq.s32.totalorder %s26, 3
      %p63 = por %p61, %p62
      %p65 = scmp.ne.s32.totalorder %s48, %s64
      %p66 = scmp.eq.s32.totalorder %s26, 0
      %p67 = por %p65, %p66
      %s68 = ssub.s32 %s27, %s39
      %p69 = scmp.eq.s32.totalorder %s68, 0
      %s71 = sadd.s32 %s70, 1
      %s72 = scalar_select %p69, %s70, %s71
      %p75 = pneg %p69
      %p76 = scmp.eq.s32.totalorder %s20, 3
      %p77 = por %p75, %p76
      %p78 = scmp.ne.s32.totalorder %s70, %s73
      %p79 = scmp.eq.s32.totalorder %s20, 0
      %p80 = por %p78, %p79
      %p81 = scmp.ne.s32.totalorder %s70, %s73
      %p82 = scmp.eq.s32.totalorder %s25, 3
      %p83 = por %p81, %p82
      %p84 = scmp.ne.s32.totalorder %s73, %s74
      %p85 = scmp.eq.s32.totalorder %s25, 0
      %p86 = por %p84, %p85
      %p87 = scmp.ne.s32.totalorder %s73, %s74
      %p88 = scmp.eq.s32.totalorder %s26, 3
      %p89 = por %p87, %p88
      %p91 = scmp.ne.s32.totalorder %s74, %s90
      %p92 = scmp.eq.s32.totalorder %s26, 0
      %p93 = por %p91, %p92
      %s94 = ssub.s32 %s27, %s39
      %p95 = scmp.eq.s32.totalorder %s94, 0
      %s97 = sadd.s32 %s96, 1
      %s98 = scalar_select %p95, %s96, %s97
      %p101 = pneg %p95
      %p102 = scmp.eq.s32.totalorder %s20, 3
      %p103 = por %p101, %p102
      %p104 = scmp.ne.s32.totalorder %s96, %s99
      %p105 = scmp.eq.s32.totalorder %s20, 0
      %p106 = por %p104, %p105
      %p107 = scmp.ne.s32.totalorder %s96, %s99
      %p108 = scmp.eq.s32.totalorder %s25, 3
      %p109 = por %p107, %p108
      %p110 = scmp.ne.s32.totalorder %s99, %s100
      %p111 = scmp.eq.s32.totalorder %s25, 0
      %p112 = por %p110, %p111
      %p113 = scmp.ne.s32.totalorder %s99, %s100
      %p114 = scmp.eq.s32.totalorder %s26, 3
      %p115 = por %p113, %p114
      %p117 = scmp.ne.s32.totalorder %s100, %s116
      %p118 = scmp.eq.s32.totalorder %s26, 0
      %p119 = por %p117, %p118
      %s121 = sadd.s32 %s120, 1
      %p124 = scmp.eq.s32.totalorder %s20, 3
      %p125 = scmp.ne.s32.totalorder %s120, %s122
      %p126 = scmp.eq.s32.totalorder %s20, 0
      %p127 = por %p125, %p126
      %p128 = scmp.ne.s32.totalorder %s120, %s122
      %p129 = scmp.eq.s32.totalorder %s25, 3
      %p130 = por %p128, %p129
      %p131 = scmp.ne.s32.totalorder %s122, %s123
      %p132 = scmp.eq.s32.totalorder %s25, 0
      %p133 = por %p131, %p132
      %p134 = scmp.ne.s32.totalorder %s122, %s123
      %p135 = scmp.eq.s32.totalorder %s26, 3
      %p136 = por %p134, %p135
      %p138 = scmp.ne.s32.totalorder %s123, %s137
      %p139 = scmp.eq.s32.totalorder %s26, 0
      %p140 = por %p138, %p139
      %s142 = sadd.s32 %s141, 1
      %p145 = scmp.eq.s32.totalorder %s20, 3
      %p146 = scmp.ne.s32.totalorder %s141, %s143
      %p147 = scmp.eq.s32.totalorder %s20, 0
      %p148 = por %p146, %p147
      %p149 = scmp.ne.s32.totalorder %s141, %s143
      %p150 = scmp.eq.s32.totalorder %s25, 3
      %p151 = por %p149, %p150
      %p152 = scmp.ne.s32.totalorder %s143, %s144
      %p153 = scmp.eq.s32.totalorder %s25, 0
      %p154 = por %p152, %p153
      %p155 = scmp.ne.s32.totalorder %s143, %s144
      %p156 = scmp.eq.s32.totalorder %s26, 3
      %p157 = por %p155, %p156
      %p159 = scmp.ne.s32.totalorder %s144, %s158
      %p160 = scmp.eq.s32.totalorder %s26, 0
      %p161 = por %p159, %p160
      %s163 = sadd.s32 %s162, 1
      %p166 = scmp.eq.s32.totalorder %s20, 3
      %p167 = scmp.ne.s32.totalorder %s162, %s164
      %p168 = scmp.eq.s32.totalorder %s20, 0
      %p169 = por %p167, %p168
      %p170 = scmp.ne.s32.totalorder %s162, %s164
      %p171 = scmp.eq.s32.totalorder %s25, 3
      %p172 = por %p170, %p171
      %p173 = scmp.ne.s32.totalorder %s164, %s165
      %p174 = scmp.eq.s32.totalorder %s25, 0
      %p175 = por %p173, %p174
      %p176 = scmp.ne.s32.totalorder %s164, %s165
      %p177 = scmp.eq.s32.totalorder %s26, 3
      %p178 = por %p176, %p177
      %p180 = scmp.ne.s32.totalorder %s165, %s179
      %p181 = scmp.eq.s32.totalorder %s26, 0
      %p182 = por %p180, %p181
      %s184 = sadd.s32 %s183, 1
      %p187 = scmp.eq.s32.totalorder %s20, 3
      %p188 = scmp.ne.s32.totalorder %s183, %s185
      %p189 = scmp.eq.s32.totalorder %s20, 0
      %p190 = por %p188, %p189
      %p191 = scmp.ne.s32.totalorder %s183, %s185
      %p192 = scmp.eq.s32.totalorder %s25, 3
      %p193 = por %p191, %p192
      %p194 = scmp.ne.s32.totalorder %s185, %s186
      %p195 = scmp.eq.s32.totalorder %s25, 0
      %p196 = por %p194, %p195
      %p197 = scmp.ne.s32.totalorder %s185, %s186
      %p198 = scmp.eq.s32.totalorder %s26, 3
      %p199 = por %p197, %p198
      %p201 = scmp.ne.s32.totalorder %s186, %s200
      %p202 = scmp.eq.s32.totalorder %s26, 0
      %p203 = por %p201, %p202
      %s205 = sadd.s32 %s204, 1
      %p208 = scmp.eq.s32.totalorder %s20, 3
      %p209 = scmp.ne.s32.totalorder %s204, %s206
      %p210 = scmp.eq.s32.totalorder %s20, 0
      %p211 = por %p209, %p210
      %p212 = scmp.ne.s32.totalorder %s204, %s206
      %p213 = scmp.eq.s32.totalorder %s25, 3
      %p214 = por %p212, %p213
      %p215 = scmp.ne.s32.totalorder %s206, %s207
      %p216 = scmp.eq.s32.totalorder %s25, 0
      %p217 = por %p215, %p216
      %p218 = scmp.ne.s32.totalorder %s206, %s207
      %p219 = scmp.eq.s32.totalorder %s26, 3
      %p220 = por %p218, %p219
      %p222 = scmp.ne.s32.totalorder %s207, %s221
      %p223 = scmp.eq.s32.totalorder %s26, 0
      %p224 = por %p222, %p223
      %s226 = sadd.s32 %s225, 1
      %p229 = scmp.eq.s32.totalorder %s20, 3
      %p230 = scmp.ne.s32.totalorder %s225, %s227
      %p231 = scmp.eq.s32.totalorder %s20, 0
      %p232 = por %p230, %p231
      %p233 = scmp.ne.s32.totalorder %s225, %s227
      %p234 = scmp.eq.s32.totalorder %s25, 3
      %p235 = por %p233, %p234
      %p236 = scmp.ne.s32.totalorder %s227, %s228
      %p237 = scmp.eq.s32.totalorder %s25, 0
      %p238 = por %p236, %p237
      %p239 = scmp.ne.s32.totalorder %s227, %s228
      %p240 = scmp.eq.s32.totalorder %s26, 3
      %p241 = por %p239, %p240
      %p243 = scmp.ne.s32.totalorder %s228, %s242
      %p244 = scmp.eq.s32.totalorder %s26, 0
      %p245 = por %p243, %p244
      %s247 = sadd.s32 %s246, 1
      %p250 = scmp.eq.s32.totalorder %s20, 3
      %p251 = scmp.ne.s32.totalorder %s246, %s248
      %p252 = scmp.eq.s32.totalorder %s20, 0
      %p253 = por %p251, %p252
      %p254 = scmp.ne.s32.totalorder %s246, %s248
      %p255 = scmp.eq.s32.totalorder %s25, 3
      %p256 = por %p254, %p255
      %p257 = scmp.ne.s32.totalorder %s248, %s249
      %p258 = scmp.eq.s32.totalorder %s25, 0
      %p259 = por %p257, %p258
      %p260 = scmp.ne.s32.totalorder %s248, %s249
      %p261 = scmp.eq.s32.totalorder %s26, 3
      %p262 = por %p260, %p261
      %p264 = scmp.ne.s32.totalorder %s249, %s263
      %p265 = scmp.eq.s32.totalorder %s26, 0
      %p266 = por %p264, %p265
      %s268 = sadd.s32 %s267, 1
      %p271 = scmp.eq.s32.totalorder %s20, 3
      %p272 = scmp.ne.s32.totalorder %s267, %s269
      %p273 = scmp.eq.s32.totalorder %s20, 0
      %p274 = por %p272, %p273
      %p275 = scmp.ne.s32.totalorder %s267, %s269
      %p276 = scmp.eq.s32.totalorder %s25, 3
      %p277 = por %p275, %p276
      %p278 = scmp.ne.s32.totalorder %s269, %s270
      %p279 = scmp.eq.s32.totalorder %s25, 0
      %p280 = por %p278, %p279
      %p281 = scmp.ne.s32.totalorder %s269, %s270
      %p282 = scmp.eq.s32.totalorder %s26, 3
      %p283 = por %p281, %p282
      %p285 = scmp.ne.s32.totalorder %s270, %s284
      %p286 = scmp.eq.s32.totalorder %s26, 0
      %p287 = por %p285, %p286
      %s288 = ssub.s32 %s27, %s39
      %s289 = ssub.s32 %s28, %s35
      %s290 = sor.u32 %s288, %s289
      %p291 = scmp.eq.s32.totalorder %s290, 0
      %s293 = sadd.s32 %s292, 1
      %s294 = scalar_select %p291, %s292, %s293
      %p297 = pneg %p291
      %p298 = scmp.eq.s32.totalorder %s20, 3
      %p299 = por %p297, %p298
      %p300 = scmp.ne.s32.totalorder %s292, %s295
      %p301 = scmp.eq.s32.totalorder %s20, 0
      %p302 = por %p300, %p301
      %p303 = scmp.ne.s32.totalorder %s292, %s295
      %p304 = scmp.eq.s32.totalorder %s25, 3
      %p305 = por %p303, %p304
      %p306 = scmp.ne.s32.totalorder %s295, %s296
      %p307 = scmp.eq.s32.totalorder %s25, 0
      %p308 = por %p306, %p307
      %p309 = scmp.ne.s32.totalorder %s295, %s296
      %p310 = scmp.eq.s32.totalorder %s26, 3
      %p311 = por %p309, %p310
      %p313 = scmp.ne.s32.totalorder %s296, %s312
      %p314 = scmp.eq.s32.totalorder %s26, 0
      %p315 = por %p313, %p314
      %p316 = scmp.le.s32.totalorder 1, %s20
      %p317 = scmp.lt.s32.totalorder %s20, 5
      %p318 = pnand %p316, %p317
      %p319 = pneg %p318
      // Predicated region
      $region9: #{decoder_layer.1} parent=5 // pred_check
        _
      $region10: #{decoder_layer.1} parent=5 // pred_check_branch
        %321 = sbr.rel (%p318) target = $region12
      $region11: #{decoder_layer.1} parent=5 // pred_region
        %s322 = ssub.s32 %s20, 1
        // Predicated region
        $region13: #{decoder_layer.1} parent=11 // pred_check
          %p323 = pneg %p133
        $region14: #{decoder_layer.1} parent=11 // pred_check_branch
          %325 = sbr.rel (%p323) target = $region16
        $region15: #{decoder_layer.1} parent=11 // pred_region
          _
        $region16: #{decoder_layer.1} parent=11 // pred_fallthru
          _
        // Predicated region
        $region17: #{decoder_layer.1} parent=11 // pred_check
          %p326 = pneg %p154
        $region18: #{decoder_layer.1} parent=11 // pred_check_branch
          %328 = sbr.rel (%p326) target = $region20
        $region19: #{decoder_layer.1} parent=11 // pred_region
          _
        $region20: #{decoder_layer.1} parent=11 // pred_fallthru
          _
        // Predicated region
        $region21: #{decoder_layer.1} parent=11 // pred_check
          %p329 = pneg %p175
        $region22: #{decoder_layer.1} parent=11 // pred_check_branch
          %331 = sbr.rel (%p329) target = $region24
        $region23: #{decoder_layer.1} parent=11 // pred_region
          _
        $region24: #{decoder_layer.1} parent=11 // pred_fallthru
          _
        // Predicated region
        $region25: #{decoder_layer.1} parent=11 // pred_check
          %p332 = pneg %p196
        $region26: #{decoder_layer.1} parent=11 // pred_check_branch
          %334 = sbr.rel (%p332) target = $region28
        $region27: #{decoder_layer.1} parent=11 // pred_region
          _
        $region28: #{decoder_layer.1} parent=11 // pred_fallthru
          _
        // Predicated region
        $region29: #{decoder_layer.1} parent=11 // pred_check
          %p335 = pneg %p217
        $region30: #{decoder_layer.1} parent=11 // pred_check_branch
          %337 = sbr.rel (%p335) target = $region32
        $region31: #{decoder_layer.1} parent=11 // pred_region
          _
        $region32: #{decoder_layer.1} parent=11 // pred_fallthru
          _
        // Predicated region
        $region33: #{decoder_layer.1} parent=11 // pred_check
          %p338 = pneg %p238
        $region34: #{decoder_layer.1} parent=11 // pred_check_branch
          %340 = sbr.rel (%p338) target = $region36
        $region35: #{decoder_layer.1} parent=11 // pred_region
          _
        $region36: #{decoder_layer.1} parent=11 // pred_fallthru
          _
        // Predicated region
        $region37: #{decoder_layer.1} parent=11 // pred_check
          %p341 = pneg %p259
        $region38: #{decoder_layer.1} parent=11 // pred_check_branch
          %343 = sbr.rel (%p341) target = $region40
        $region39: #{decoder_layer.1} parent=11 // pred_region
          _
        $region40: #{decoder_layer.1} parent=11 // pred_fallthru
          _
        // Predicated region
        $region41: #{decoder_layer.1} parent=11 // pred_check
          %p344 = pneg %p280
        $region42: #{decoder_layer.1} parent=11 // pred_check_branch
          %346 = sbr.rel (%p344) target = $region44
        $region43: #{decoder_layer.1} parent=11 // pred_region
          _
        $region44: #{decoder_layer.1} parent=11 // pred_fallthru
          _
      $region12: #{decoder_layer.1} parent=5 // pred_fallthru
        _
      %p347 = scmp.lt.s32.totalorder %s20, 4
      // Predicated region
      $region45: #{decoder_layer.1} parent=5 // pred_check
        %p348 = pneg %p347
      $region46: #{decoder_layer.1} parent=5 // pred_check_branch
        %350 = sbr.rel (%p348) target = $region48
      $region47: #{decoder_layer.1} parent=5 // pred_region
        // Predicated region
        $region49: #{decoder_layer.1} parent=47 // pred_check
          %p351 = pneg %p54
        $region50: #{decoder_layer.1} parent=47 // pred_check_branch
          %353 = sbr.rel (%p351) target = $region52
        $region51: #{decoder_layer.1} parent=47 // pred_region
          %p354 = scmp.lt.s32.totalorder %s27, 1
          %s355 = scalar_select %p354, %s27, 1
          %p356 = scmp.lt.s32.totalorder %s28, 1
          %s357 = scalar_select %p356, %s28, 1
          %s358 = smul.addr %s355, 2
          %s359 = sadd.s32 %s357, %s358
          %s360 = smul.addr %s359, 8
          %s361 = scalar_lea.vmem %s0, %s360
        $region52: #{decoder_layer.1} parent=47 // pred_fallthru
          _
        // Predicated region
        $region53: #{decoder_layer.1} parent=47 // pred_check
          %p362 = pneg %p80
        $region54: #{decoder_layer.1} parent=47 // pred_check_branch
          %364 = sbr.rel (%p362) target = $region56
        $region55: #{decoder_layer.1} parent=47 // pred_region
          %p365 = scmp.lt.s32.totalorder %s27, 1
          %s366 = scalar_select %p365, %s27, 1
          %s367 = smul.addr %s366, 4
          %s368 = smul.addr %s367, 8
          %s369 = scalar_lea.vmem %s1, %s368
        $region56: #{decoder_layer.1} parent=47 // pred_fallthru
          _
        // Predicated region
        $region57: #{decoder_layer.1} parent=47 // pred_check
          %p370 = pneg %p106
        $region58: #{decoder_layer.1} parent=47 // pred_check_branch
          %372 = sbr.rel (%p370) target = $region60
        $region59: #{decoder_layer.1} parent=47 // pred_region
          %p373 = scmp.lt.s32.totalorder %s27, 1
          %s374 = scalar_select %p373, %s27, 1
          %s375 = smul.addr %s374, 4
          %s376 = smul.addr %s375, 8
          %s377 = scalar_lea.vmem %s2, %s376
        $region60: #{decoder_layer.1} parent=47 // pred_fallthru
          _
      $region48: #{decoder_layer.1} parent=5 // pred_fallthru
        _
      %p378 = scmp.le.s32.totalorder 1, %s20
      %p379 = scmp.lt.s32.totalorder %s20, 5
      %p380 = pnand %p378, %p379
      %p381 = pneg %p380
      // Predicated region
      $region61: #{decoder_layer.1} parent=5 // pred_check
        _
      $region62: #{decoder_layer.1} parent=5 // pred_check_branch
        %383 = sbr.rel (%p380) target = $region64
      $region63: #{decoder_layer.1} parent=5 // pred_region
        %s384 = ssub.s32 %s20, 1
        %p385 = scmp.lt.s32.totalorder %s29, 1
        %s386 = scalar_select %p385, %s29, 1
        %p387 = scmp.lt.s32.totalorder %s30, 1
        %s388 = scalar_select %p387, %s30, 1
        %s389 = smul.addr %s386, 2
        %s390 = sadd.s32 %s388, %s389
        %s391 = smul.addr %s390, 8
        %s392 = scalar_lea.vmem %s0, %s391
        %p393 = pneg %p60
        %p394 = pneg %p57
        %p395 = scmp.lt.s32.totalorder %s29, 1
        %s396 = scalar_select %p395, %s29, 1
        %s397 = smul.addr %s396, 4
        %s398 = smul.addr %s397, 8
        %s399 = scalar_lea.vmem %s1, %s398
        %p400 = pneg %p86
        %p401 = pneg %p83
        %p402 = scmp.lt.s32.totalorder %s29, 1
        %s403 = scalar_select %p402, %s29, 1
        %s404 = smul.addr %s403, 4
        %s405 = smul.addr %s404, 8
        %s406 = scalar_lea.vmem %s2, %s405
        %p407 = pneg %p112
        %p408 = pneg %p109
        %p409 = pneg %p133
        %p410 = pneg %p130
        %p411 = pneg %p154
        %p412 = pneg %p151
        %p413 = pneg %p175
        %p414 = pneg %p172
        %p415 = pneg %p196
        %p416 = pneg %p193
        %p417 = pneg %p217
        %p418 = pneg %p214
        %p419 = pneg %p238
        %p420 = pneg %p235
        %p421 = pneg %p259
        %p422 = pneg %p256
        %p423 = pneg %p280
        %p424 = pneg %p277
        %p425 = pneg %p308
        %p426 = pneg %p305
        %s427 = sand.u32 %s295, 1
        %s428 = scalar_lea.sflag [#allocation3], %s427
        %s429 = sand.u32 %s295, 1
        %s430 = smul.addr %s429, 8
        %s431 = scalar_lea.vmem [#allocation2], %s430
        %p432 = scmp.lt.s32.totalorder %s29, 1
        %s433 = scalar_select %p432, %s29, 1
        %p434 = scmp.lt.s32.totalorder %s30, 1
        %s435 = scalar_select %p434, %s30, 1
        %s436 = smul.addr %s433, 2
        %s437 = sadd.s32 %s435, %s436
        %s438 = smul.addr %s437, 8
        %s439 = scalar_lea.vmem %s0, %s438
        %p440 = scmp.lt.s32.totalorder %s29, 1
        %s441 = scalar_select %p440, %s29, 1
        %s442 = smul.addr %s441, 4
        %s443 = smul.addr %s442, 8
        %s444 = scalar_lea.vmem %s1, %s443
        %p445 = scmp.lt.s32.totalorder %s29, 1
        %s446 = scalar_select %p445, %s29, 1
        %s447 = smul.addr %s446, 4
        %s448 = smul.addr %s447, 8
        %s449 = scalar_lea.vmem %s2, %s448
        %v450 = vld [vmem:[%s439] sm:$0xff]
        %v451 = vld [vmem:[%s444] sm:$0xff]
        %v452 = vld [vmem:[%s444 + $0x8] sm:$0xff]
        %v453 = vld [vmem:[%s444 + $0x10] sm:$0xff]
        %v454 = vld [vmem:[%s444 + $0x18] sm:$0xff]
        %v455 = vld [vmem:[%s449] sm:$0xff]
        %v456 = vld [vmem:[%s449 + $0x8] sm:$0xff]
        %v457 = vld [vmem:[%s449 + $0x10] sm:$0xff]
        %v458 = vld [vmem:[%s449 + $0x18] sm:$0xff]
        %v459 = vld [vmem:[%s3] sm:$0xff]
        %v460 = vld [vmem:[%s3 + $0x8] sm:$0xff]
        %v461 = vld [vmem:[%s3 + $0x10] sm:$0xff]
        %v462 = vld [vmem:[%s3 + $0x18] sm:$0xff]
        %v463 = vld [vmem:[%s3 + $0x20] sm:$0xff]
        %v464 = vld [vmem:[%s3 + $0x28] sm:$0xff]
        %v465 = vld [vmem:[%s3 + $0x30] sm:$0xff]
        %v466 = vld [vmem:[%s3 + $0x38] sm:$0xff]
        %v467 = vld [vmem:[%s3 + $0x40] sm:$0xff]
        %v468 = vld [vmem:[%s3 + $0x48] sm:$0xff]
        %v469 = vld [vmem:[%s3 + $0x50] sm:$0xff]
        %v470 = vld [vmem:[%s3 + $0x58] sm:$0xff]
        %v471 = vld [vmem:[%s3 + $0x60] sm:$0xff]
        %v472 = vld [vmem:[%s3 + $0x68] sm:$0xff]
        %v473 = vld [vmem:[%s3 + $0x70] sm:$0xff]
        %v474 = vld [vmem:[%s3 + $0x78] sm:$0xff]
        %v475 = vld [vmem:[%s4] sm:$0x1]
        %s476 = scalar_lea.vmem %s3, 128
        %v477 = vld [vmem:[%s476] sm:$0xff]
        %v478 = vld [vmem:[%s476 + $0x8] sm:$0xff]
        %v479 = vld [vmem:[%s476 + $0x10] sm:$0xff]
        %v480 = vld [vmem:[%s476 + $0x18] sm:$0xff]
        %v481 = vld [vmem:[%s476 + $0x20] sm:$0xff]
        %v482 = vld [vmem:[%s476 + $0x28] sm:$0xff]
        %v483 = vld [vmem:[%s476 + $0x30] sm:$0xff]
        %v484 = vld [vmem:[%s476 + $0x38] sm:$0xff]
        %v485 = vld [vmem:[%s476 + $0x40] sm:$0xff]
        %v486 = vld [vmem:[%s476 + $0x48] sm:$0xff]
        %v487 = vld [vmem:[%s476 + $0x50] sm:$0xff]
        %v488 = vld [vmem:[%s476 + $0x58] sm:$0xff]
        %v489 = vld [vmem:[%s476 + $0x60] sm:$0xff]
        %v490 = vld [vmem:[%s476 + $0x68] sm:$0xff]
        %v491 = vld [vmem:[%s476 + $0x70] sm:$0xff]
        %v492 = vld [vmem:[%s476 + $0x78] sm:$0xff]
        %v493 = vld [vmem:[%s4 + $0x1] sm:$0x1]
        %v494 = vlaneseq
        %v495 = vshrl.u32 %v494, 7
        %v496 = vsub.s32 0, %v495
        %v497 = vrot.slane %v475, %v496
        %498 = vmatprep.subr.mxu0 0.0
        %499 = vmatpush1.msra.mxu0 %v474
        %500 = vmatprep.subr.mxu0 0.0
        %501 = vmatpush1.msra.mxu0 %v473
        %502 = vmatprep.subr.mxu0 0.0
        %503 = vmatpush1.msra.mxu0 %v472
        %504 = vmatprep.subr.mxu0 0.0
        %505 = vmatpush1.msra.mxu0 %v471
        %506 = vmatprep.subr.mxu0 0.0
        %507 = vmatpush1.msra.mxu0 %v470
        %508 = vmatprep.subr.mxu0 0.0
        %509 = vmatpush1.msra.mxu0 %v469
        %510 = vmatprep.subr.mxu0 0.0
        %511 = vmatpush1.msra.mxu0 %v468
        %512 = vmatprep.subr.mxu0 0.0
        %513 = vmatpush1.msra.mxu0 %v467
        %514 = vmatprep.subr.mxu0 0.0
        %515 = vmatpush1.msra.mxu0 %v466
        %516 = vmatprep.subr.mxu0 0.0
        %517 = vmatpush1.msra.mxu0 %v465
        %518 = vmatprep.subr.mxu0 0.0
        %519 = vmatpush1.msra.mxu0 %v464
        %520 = vmatprep.subr.mxu0 0.0
        %521 = vmatpush1.msra.mxu0 %v463
        %522 = vmatprep.subr.mxu0 0.0
        %523 = vmatpush1.msra.mxu0 %v462
        %524 = vmatprep.subr.mxu0 0.0
        %525 = vmatpush1.msra.mxu0 %v461
        %526 = vmatprep.subr.mxu0 0.0
        %527 = vmatpush1.msra.mxu0 %v460
        %528 = vmatprep.subr.mxu0 0.0
        %529 = vmatpush1.msra.mxu0 %v459
        %530 = vmatprep.subr.mxu0 0.0
        %531 = vmatpush2.msra.mxu0 0.0
        %532 = vmatprep.subr.mxu0 0.0
        %533 = vmatpush2.msra.mxu0 0.0
        %534 = vmatprep.subr.mxu0 0.0
        %535 = vmatpush2.msra.mxu0 0.0
        %536 = vmatprep.subr.mxu0 0.0
        %537 = vmatpush2.msra.mxu0 0.0
        %538 = vmatprep.subr.mxu0 0.0
        %539 = vmatpush2.msra.mxu0 0.0
        %540 = vmatprep.subr.mxu0 0.0
        %541 = vmatpush2.msra.mxu0 0.0
        %542 = vmatprep.subr.mxu0 0.0
        %543 = vmatpush2.msra.mxu0 0.0
        %544 = vmatprep.subr.mxu0 0.0
        %545 = vmatpush2.msra.mxu0 0.0
        %546 = vmatprep.subr.mxu0 0.0
        %547 = vmatpush2.msra.mxu0 0.0
        %548 = vmatprep.subr.mxu0 0.0
        %549 = vmatpush2.msra.mxu0 0.0
        %550 = vmatprep.subr.mxu0 0.0
        %551 = vmatpush2.msra.mxu0 0.0
        %552 = vmatprep.subr.mxu0 0.0
        %553 = vmatpush2.msra.mxu0 0.0
        %554 = vmatprep.subr.mxu0 0.0
        %555 = vmatpush2.msra.mxu0 0.0
        %556 = vmatprep.subr.mxu0 0.0
        %557 = vmatpush2.msra.mxu0 0.0
        %558 = vmatprep.subr.mxu0 0.0
        %559 = vmatpush2.msra.mxu0 0.0
        %560 = vmatprep.subr.mxu0 0.0
        %561 = vmatpush2.msra.mxu0 0.0
        %562 = vmatprep.mubr.f32.mxu0 0.0
        %563 = vmatmul.mubr.f32.gmra.mxu0 %v450
        %v564 = vpop.f32.mrf.mxu0
        %v565 = vadd.f32 %v497, %v564
        %v566 = vpop.f32.mrf.mxu0
        %567 = vdwg.mxu0
        %v568 = vmul.f32 %v565, 0.088388346
        %569 = vmatprep.subr.mxu0 0.0
        %570 = vmatpush1.xpose.msra.mxu0 0.0
        %571 = vmatprep.subr.mxu0 0.0
        %572 = vmatpush1.xpose.msra.mxu0 0.0
        %573 = vmatprep.subr.mxu0 0.0
        %574 = vmatpush1.xpose.msra.mxu0 0.0
        %575 = vmatprep.subr.mxu0 0.0
        %576 = vmatpush1.xpose.msra.mxu0 0.0
        %577 = vmatprep.subr.mxu0 0.0
        %578 = vmatpush1.xpose.msra.mxu0 0.0
        %579 = vmatprep.subr.mxu0 0.0
        %580 = vmatpush1.xpose.msra.mxu0 0.0
        %581 = vmatprep.subr.mxu0 0.0
        %582 = vmatpush1.xpose.msra.mxu0 0.0
        %583 = vmatprep.subr.mxu0 0.0
        %584 = vmatpush1.xpose.msra.mxu0 0.0
        %585 = vmatprep.subr.mxu0 0.0
        %586 = vmatpush1.xpose.msra.mxu0 0.0
        %587 = vmatprep.subr.mxu0 0.0
        %588 = vmatpush1.xpose.msra.mxu0 0.0
        %589 = vmatprep.subr.mxu0 0.0
        %590 = vmatpush1.xpose.msra.mxu0 0.0
        %591 = vmatprep.subr.mxu0 0.0
        %592 = vmatpush1.xpose.msra.mxu0 0.0
        %593 = vmatprep.subr.mxu0 0.0
        %594 = vmatpush1.xpose.msra.mxu0 0.0
        %595 = vmatprep.subr.mxu0 0.0
        %596 = vmatpush1.xpose.msra.mxu0 0.0
        %597 = vmatprep.subr.mxu0 0.0
        %598 = vmatpush1.xpose.msra.mxu0 %v453
        %599 = vmatprep.subr.mxu0 0.0
        %600 = vmatpush1.xpose.msra.mxu0 %v451
        %601 = vmatprep.subr.mxu0 0.0
        %602 = vmatpush2.xpose.msra.mxu0 0.0
        %603 = vmatprep.subr.mxu0 0.0
        %604 = vmatpush2.xpose.msra.mxu0 0.0
        %605 = vmatprep.subr.mxu0 0.0
        %606 = vmatpush2.xpose.msra.mxu0 0.0
        %607 = vmatprep.subr.mxu0 0.0
        %608 = vmatpush2.xpose.msra.mxu0 0.0
        %609 = vmatprep.subr.mxu0 0.0
        %610 = vmatpush2.xpose.msra.mxu0 0.0
        %611 = vmatprep.subr.mxu0 0.0
        %612 = vmatpush2.xpose.msra.mxu0 0.0
        %613 = vmatprep.subr.mxu0 0.0
        %614 = vmatpush2.xpose.msra.mxu0 0.0
        %615 = vmatprep.subr.mxu0 0.0
        %616 = vmatpush2.xpose.msra.mxu0 0.0
        %617 = vmatprep.subr.mxu0 0.0
        %618 = vmatpush2.xpose.msra.mxu0 0.0
        %619 = vmatprep.subr.mxu0 0.0
        %620 = vmatpush2.xpose.msra.mxu0 0.0
        %621 = vmatprep.subr.mxu0 0.0
        %622 = vmatpush2.xpose.msra.mxu0 0.0
        %623 = vmatprep.subr.mxu0 0.0
        %624 = vmatpush2.xpose.msra.mxu0 0.0
        %625 = vmatprep.subr.mxu0 0.0
        %626 = vmatpush2.xpose.msra.mxu0 0.0
        %627 = vmatprep.subr.mxu0 0.0
        %628 = vmatpush2.xpose.msra.mxu0 0.0
        %629 = vmatprep.subr.mxu0 0.0
        %630 = vmatpush2.xpose.msra.mxu0 0.0
        %631 = vmatprep.subr.mxu0 0.0
        %632 = vmatpush2.xpose.msra.mxu0 0.0
        %633 = vmatprep.mubr.f32.mxu0 0.0
        %634 = vmatmul.mubr.f32.gmra.mxu0 %v568
        %v635 = vpop.f32.mrf.mxu0
        %v636 = vadd.f32 0.0, %v635
        %v637 = vpop.f32.mrf.mxu0
        %638 = vdwg.mxu0
        %vm639 = vcmask 130048
        %v640 = vsel %vm639, %v636, -inf
        %641 = vmax.xlane.f32.xlu0 %v640
        %v642 = vpop.xlane.xlu0 %641
        %v643 = vsub.f32 %v636, %v642
        %v644 = vmul.f32 %v643, 1.442695
        %v645 = vpow.pop %v644
        %v646 = vsel %vm639, %v645, 0.0
        %647 = vadd.xlane.f32.xlu0 %v646
        %v648 = vpop.xlane.xlu0 %647
        %v649 = vrcp.pop %v648
        %v650 = vmul.f32 %v645, %v649
        %v652 = vsel %vm639, %v650, 0
        %654 = vmatprep.subr.mxu0 0.0
        %655 = vmatpush1.msra.mxu0 0.0
        %656 = vmatprep.subr.mxu0 0.0
        %657 = vmatpush1.msra.mxu0 0.0
        %658 = vmatprep.subr.mxu0 0.0
        %659 = vmatpush1.msra.mxu0 0.0
        %660 = vmatprep.subr.mxu0 0.0
        %661 = vmatpush1.msra.mxu0 0.0
        %662 = vmatprep.subr.mxu0 0.0
        %663 = vmatpush1.msra.mxu0 0.0
        %664 = vmatprep.subr.mxu0 0.0
        %665 = vmatpush1.msra.mxu0 0.0
        %666 = vmatprep.subr.mxu0 0.0
        %667 = vmatpush1.msra.mxu0 0.0
        %668 = vmatprep.subr.mxu0 0.0
        %669 = vmatpush1.msra.mxu0 0.0
        %670 = vmatprep.subr.mxu0 0.0
        %671 = vmatpush1.msra.mxu0 0.0
        %672 = vmatprep.subr.mxu0 0.0
        %673 = vmatpush1.msra.mxu0 0.0
        %674 = vmatprep.subr.mxu0 0.0
        %675 = vmatpush1.msra.mxu0 0.0
        %676 = vmatprep.subr.mxu0 0.0
        %677 = vmatpush1.msra.mxu0 0.0
        %678 = vmatprep.subr.mxu0 0.0
        %679 = vmatpush1.msra.mxu0 0.0
        %680 = vmatprep.subr.mxu0 0.0
        %681 = vmatpush1.msra.mxu0 0.0
        %682 = vmatprep.subr.mxu0 0.0
        %683 = vmatpush1.msra.mxu0 %v454
        %684 = vmatprep.subr.mxu0 0.0
        %685 = vmatpush1.msra.mxu0 %v452
        %686 = vmatprep.subr.mxu0 0.0
        %687 = vmatpush2.msra.mxu0 0.0
        %688 = vmatprep.subr.mxu0 0.0
        %689 = vmatpush2.msra.mxu0 0.0
        %690 = vmatprep.subr.mxu0 0.0
        %691 = vmatpush2.msra.mxu0 0.0
        %692 = vmatprep.subr.mxu0 0.0
        %693 = vmatpush2.msra.mxu0 0.0
        %694 = vmatprep.subr.mxu0 0.0
        %695 = vmatpush2.msra.mxu0 0.0
        %696 = vmatprep.subr.mxu0 0.0
        %697 = vmatpush2.msra.mxu0 0.0
        %698 = vmatprep.subr.mxu0 0.0
        %699 = vmatpush2.msra.mxu0 0.0
        %700 = vmatprep.subr.mxu0 0.0
        %701 = vmatpush2.msra.mxu0 0.0
        %702 = vmatprep.subr.mxu0 0.0
        %703 = vmatpush2.msra.mxu0 0.0
        %704 = vmatprep.subr.mxu0 0.0
        %705 = vmatpush2.msra.mxu0 0.0
        %706 = vmatprep.subr.mxu0 0.0
        %707 = vmatpush2.msra.mxu0 0.0
        %708 = vmatprep.subr.mxu0 0.0
        %709 = vmatpush2.msra.mxu0 0.0
        %710 = vmatprep.subr.mxu0 0.0
        %711 = vmatpush2.msra.mxu0 0.0
        %712 = vmatprep.subr.mxu0 0.0
        %713 = vmatpush2.msra.mxu0 0.0
        %714 = vmatprep.subr.mxu0 0.0
        %715 = vmatpush2.msra.mxu0 0.0
        %716 = vmatprep.subr.mxu0 0.0
        %717 = vmatpush2.msra.mxu0 0.0
        %718 = vmatprep.mubr.f32.mxu0 0.0
        %719 = vmatmul.mubr.f32.gmra.mxu0 %v652
        %v720 = vpop.f32.mrf.mxu0
        %v721 = vadd.f32 0.0, %v720
        %v722 = vpop.f32.mrf.mxu0
        %723 = vdwg.mxu0
        %v724 = vlaneseq
        %v725 = vshrl.u32 %v724, 7
        %v726 = vsub.s32 0, %v725
        %v727 = vrot.slane %v493, %v726
        %728 = vmatprep.subr.mxu0 0.0
        %729 = vmatpush1.msra.mxu0 %v492
        %730 = vmatprep.subr.mxu0 0.0
        %731 = vmatpush1.msra.mxu0 %v491
        %732 = vmatprep.subr.mxu0 0.0
        %733 = vmatpush1.msra.mxu0 %v490
        %734 = vmatprep.subr.mxu0 0.0
        %735 = vmatpush1.msra.mxu0 %v489
        %736 = vmatprep.subr.mxu0 0.0
        %737 = vmatpush1.msra.mxu0 %v488
        %738 = vmatprep.subr.mxu0 0.0
        %739 = vmatpush1.msra.mxu0 %v487
        %740 = vmatprep.subr.mxu0 0.0
        %741 = vmatpush1.msra.mxu0 %v486
        %742 = vmatprep.subr.mxu0 0.0
        %743 = vmatpush1.msra.mxu0 %v485
        %744 = vmatprep.subr.mxu0 0.0
        %745 = vmatpush1.msra.mxu0 %v484
        %746 = vmatprep.subr.mxu0 0.0
        %747 = vmatpush1.msra.mxu0 %v483
        %748 = vmatprep.subr.mxu0 0.0
        %749 = vmatpush1.msra.mxu0 %v482
        %750 = vmatprep.subr.mxu0 0.0
        %751 = vmatpush1.msra.mxu0 %v481
        %752 = vmatprep.subr.mxu0 0.0
        %753 = vmatpush1.msra.mxu0 %v480
        %754 = vmatprep.subr.mxu0 0.0
        %755 = vmatpush1.msra.mxu0 %v479
        %756 = vmatprep.subr.mxu0 0.0
        %757 = vmatpush1.msra.mxu0 %v478
        %758 = vmatprep.subr.mxu0 0.0
        %759 = vmatpush1.msra.mxu0 %v477
        %760 = vmatprep.subr.mxu0 0.0
        %761 = vmatpush2.msra.mxu0 0.0
        %762 = vmatprep.subr.mxu0 0.0
        %763 = vmatpush2.msra.mxu0 0.0
        %764 = vmatprep.subr.mxu0 0.0
        %765 = vmatpush2.msra.mxu0 0.0
        %766 = vmatprep.subr.mxu0 0.0
        %767 = vmatpush2.msra.mxu0 0.0
        %768 = vmatprep.subr.mxu0 0.0
        %769 = vmatpush2.msra.mxu0 0.0
        %770 = vmatprep.subr.mxu0 0.0
        %771 = vmatpush2.msra.mxu0 0.0
        %772 = vmatprep.subr.mxu0 0.0
        %773 = vmatpush2.msra.mxu0 0.0
        %774 = vmatprep.subr.mxu0 0.0
        %775 = vmatpush2.msra.mxu0 0.0
        %776 = vmatprep.subr.mxu0 0.0
        %777 = vmatpush2.msra.mxu0 0.0
        %778 = vmatprep.subr.mxu0 0.0
        %779 = vmatpush2.msra.mxu0 0.0
        %780 = vmatprep.subr.mxu0 0.0
        %781 = vmatpush2.msra.mxu0 0.0
        %782 = vmatprep.subr.mxu0 0.0
        %783 = vmatpush2.msra.mxu0 0.0
        %784 = vmatprep.subr.mxu0 0.0
        %785 = vmatpush2.msra.mxu0 0.0
        %786 = vmatprep.subr.mxu0 0.0
        %787 = vmatpush2.msra.mxu0 0.0
        %788 = vmatprep.subr.mxu0 0.0
        %789 = vmatpush2.msra.mxu0 0.0
        %790 = vmatprep.subr.mxu0 0.0
        %791 = vmatpush2.msra.mxu0 0.0
        %792 = vmatprep.mubr.f32.mxu0 0.0
        %793 = vmatmul.mubr.f32.gmra.mxu0 %v721
        %v794 = vpop.f32.mrf.mxu0
        %v795 = vadd.f32 %v727, %v794
        %v796 = vpop.f32.mrf.mxu0
        %797 = vdwg.mxu0
        %v798 = vadd.f32 %v450, %v795
        %v799 = vld [vmem:[%s5] sm:$0x1]
        %v800 = vld [vmem:[%s6] sm:$0x1]
        %801 = vadd.xlane.f32.xlu0 %v798
        %v802 = vpop.xlane.xlu0 %801
        %v803 = vrcp.pop 128.0
        %v804 = vmul.f32 %v802, %v803
        %v805 = vsub.f32 %v798, %v804
        %v806 = vmul.f32 %v805, %v805
        %807 = vadd.xlane.f32.xlu0 %v806
        %v808 = vpop.xlane.xlu0 %807
        %v809 = vmul.f32 %v808, %v803
        %v810 = vadd.f32 %v809, 1e-05
        %v811 = vrsqrt.pop %v810
        %v812 = vmul.f32 %v805, %v811
        %v813 = vlaneseq
        %v814 = vshrl.u32 %v813, 7
        %v815 = vsub.s32 0, %v814
        %v816 = vrot.slane %v799, %v815
        %v817 = vmul.f32 %v812, %v816
        %v818 = vlaneseq
        %v819 = vshrl.u32 %v818, 7
        %v820 = vsub.s32 0, %v819
        %v821 = vrot.slane %v800, %v820
        %v822 = vadd.f32 %v817, %v821
        %s823 = scalar_lea.vmem %s3, 256
        %v824 = vld [vmem:[%s823] sm:$0xff]
        %v825 = vld [vmem:[%s823 + $0x8] sm:$0xff]
        %v826 = vld [vmem:[%s823 + $0x10] sm:$0xff]
        %v827 = vld [vmem:[%s823 + $0x18] sm:$0xff]
        %v828 = vld [vmem:[%s823 + $0x20] sm:$0xff]
        %v829 = vld [vmem:[%s823 + $0x28] sm:$0xff]
        %v830 = vld [vmem:[%s823 + $0x30] sm:$0xff]
        %v831 = vld [vmem:[%s823 + $0x38] sm:$0xff]
        %v832 = vld [vmem:[%s823 + $0x40] sm:$0xff]
        %v833 = vld [vmem:[%s823 + $0x48] sm:$0xff]
        %v834 = vld [vmem:[%s823 + $0x50] sm:$0xff]
        %v835 = vld [vmem:[%s823 + $0x58] sm:$0xff]
        %v836 = vld [vmem:[%s823 + $0x60] sm:$0xff]
        %v837 = vld [vmem:[%s823 + $0x68] sm:$0xff]
        %v838 = vld [vmem:[%s823 + $0x70] sm:$0xff]
        %v839 = vld [vmem:[%s823 + $0x78] sm:$0xff]
        %v840 = vld [vmem:[%s4 + $0x2] sm:$0x1]
        %s841 = scalar_lea.vmem %s3, 384
        %v842 = vld [vmem:[%s841] sm:$0xff]
        %v843 = vld [vmem:[%s841 + $0x8] sm:$0xff]
        %v844 = vld [vmem:[%s841 + $0x10] sm:$0xff]
        %v845 = vld [vmem:[%s841 + $0x18] sm:$0xff]
        %v846 = vld [vmem:[%s841 + $0x20] sm:$0xff]
        %v847 = vld [vmem:[%s841 + $0x28] sm:$0xff]
        %v848 = vld [vmem:[%s841 + $0x30] sm:$0xff]
        %v849 = vld [vmem:[%s841 + $0x38] sm:$0xff]
        %v850 = vld [vmem:[%s841 + $0x40] sm:$0xff]
        %v851 = vld [vmem:[%s841 + $0x48] sm:$0xff]
        %v852 = vld [vmem:[%s841 + $0x50] sm:$0xff]
        %v853 = vld [vmem:[%s841 + $0x58] sm:$0xff]
        %v854 = vld [vmem:[%s841 + $0x60] sm:$0xff]
        %v855 = vld [vmem:[%s841 + $0x68] sm:$0xff]
        %v856 = vld [vmem:[%s841 + $0x70] sm:$0xff]
        %v857 = vld [vmem:[%s841 + $0x78] sm:$0xff]
        %v858 = vld [vmem:[%s4 + $0x3] sm:$0x1]
        %v859 = vlaneseq
        %v860 = vshrl.u32 %v859, 7
        %v861 = vsub.s32 0, %v860
        %v862 = vrot.slane %v840, %v861
        %863 = vmatprep.subr.mxu0 0.0
        %864 = vmatpush1.msra.mxu0 %v839
        %865 = vmatprep.subr.mxu0 0.0
        %866 = vmatpush1.msra.mxu0 %v838
        %867 = vmatprep.subr.mxu0 0.0
        %868 = vmatpush1.msra.mxu0 %v837
        %869 = vmatprep.subr.mxu0 0.0
        %870 = vmatpush1.msra.mxu0 %v836
        %871 = vmatprep.subr.mxu0 0.0
        %872 = vmatpush1.msra.mxu0 %v835
        %873 = vmatprep.subr.mxu0 0.0
        %874 = vmatpush1.msra.mxu0 %v834
        %875 = vmatprep.subr.mxu0 0.0
        %876 = vmatpush1.msra.mxu0 %v833
        %877 = vmatprep.subr.mxu0 0.0
        %878 = vmatpush1.msra.mxu0 %v832
        %879 = vmatprep.subr.mxu0 0.0
        %880 = vmatpush1.msra.mxu0 %v831
        %881 = vmatprep.subr.mxu0 0.0
        %882 = vmatpush1.msra.mxu0 %v830
        %883 = vmatprep.subr.mxu0 0.0
        %884 = vmatpush1.msra.mxu0 %v829
        %885 = vmatprep.subr.mxu0 0.0
        %886 = vmatpush1.msra.mxu0 %v828
        %887 = vmatprep.subr.mxu0 0.0
        %888 = vmatpush1.msra.mxu0 %v827
        %889 = vmatprep.subr.mxu0 0.0
        %890 = vmatpush1.msra.mxu0 %v826
        %891 = vmatprep.subr.mxu0 0.0
        %892 = vmatpush1.msra.mxu0 %v825
        %893 = vmatprep.subr.mxu0 0.0
        %894 = vmatpush1.msra.mxu0 %v824
        %895 = vmatprep.subr.mxu0 0.0
        %896 = vmatpush2.msra.mxu0 0.0
        %897 = vmatprep.subr.mxu0 0.0
        %898 = vmatpush2.msra.mxu0 0.0
        %899 = vmatprep.subr.mxu0 0.0
        %900 = vmatpush2.msra.mxu0 0.0
        %901 = vmatprep.subr.mxu0 0.0
        %902 = vmatpush2.msra.mxu0 0.0
        %903 = vmatprep.subr.mxu0 0.0
        %904 = vmatpush2.msra.mxu0 0.0
        %905 = vmatprep.subr.mxu0 0.0
        %906 = vmatpush2.msra.mxu0 0.0
        %907 = vmatprep.subr.mxu0 0.0
        %908 = vmatpush2.msra.mxu0 0.0
        %909 = vmatprep.subr.mxu0 0.0
        %910 = vmatpush2.msra.mxu0 0.0
        %911 = vmatprep.subr.mxu0 0.0
        %912 = vmatpush2.msra.mxu0 0.0
        %913 = vmatprep.subr.mxu0 0.0
        %914 = vmatpush2.msra.mxu0 0.0
        %915 = vmatprep.subr.mxu0 0.0
        %916 = vmatpush2.msra.mxu0 0.0
        %917 = vmatprep.subr.mxu0 0.0
        %918 = vmatpush2.msra.mxu0 0.0
        %919 = vmatprep.subr.mxu0 0.0
        %920 = vmatpush2.msra.mxu0 0.0
        %921 = vmatprep.subr.mxu0 0.0
        %922 = vmatpush2.msra.mxu0 0.0
        %923 = vmatprep.subr.mxu0 0.0
        %924 = vmatpush2.msra.mxu0 0.0
        %925 = vmatprep.subr.mxu0 0.0
        %926 = vmatpush2.msra.mxu0 0.0
        %927 = vmatprep.mubr.f32.mxu0 0.0
        %928 = vmatmul.mubr.f32.gmra.mxu0 %v822
        %v929 = vpop.f32.mrf.mxu0
        %v930 = vadd.f32 %v862, %v929
        %v931 = vpop.f32.mrf.mxu0
        %932 = vdwg.mxu0
        %v933 = vmul.f32 %v930, 0.088388346
        %934 = vmatprep.subr.mxu0 0.0
        %935 = vmatpush1.xpose.msra.mxu0 0.0
        %936 = vmatprep.subr.mxu0 0.0
        %937 = vmatpush1.xpose.msra.mxu0 0.0
        %938 = vmatprep.subr.mxu0 0.0
        %939 = vmatpush1.xpose.msra.mxu0 0.0
        %940 = vmatprep.subr.mxu0 0.0
        %941 = vmatpush1.xpose.msra.mxu0 0.0
        %942 = vmatprep.subr.mxu0 0.0
        %943 = vmatpush1.xpose.msra.mxu0 0.0
        %944 = vmatprep.subr.mxu0 0.0
        %945 = vmatpush1.xpose.msra.mxu0 0.0
        %946 = vmatprep.subr.mxu0 0.0
        %947 = vmatpush1.xpose.msra.mxu0 0.0
        %948 = vmatprep.subr.mxu0 0.0
        %949 = vmatpush1.xpose.msra.mxu0 0.0
        %950 = vmatprep.subr.mxu0 0.0
        %951 = vmatpush1.xpose.msra.mxu0 0.0
        %952 = vmatprep.subr.mxu0 0.0
        %953 = vmatpush1.xpose.msra.mxu0 0.0
        %954 = vmatprep.subr.mxu0 0.0
        %955 = vmatpush1.xpose.msra.mxu0 0.0
        %956 = vmatprep.subr.mxu0 0.0
        %957 = vmatpush1.xpose.msra.mxu0 0.0
        %958 = vmatprep.subr.mxu0 0.0
        %959 = vmatpush1.xpose.msra.mxu0 0.0
        %960 = vmatprep.subr.mxu0 0.0
        %961 = vmatpush1.xpose.msra.mxu0 0.0
        %962 = vmatprep.subr.mxu0 0.0
        %963 = vmatpush1.xpose.msra.mxu0 %v457
        %964 = vmatprep.subr.mxu0 0.0
        %965 = vmatpush1.xpose.msra.mxu0 %v455
        %966 = vmatprep.subr.mxu0 0.0
        %967 = vmatpush2.xpose.msra.mxu0 0.0
        %968 = vmatprep.subr.mxu0 0.0
        %969 = vmatpush2.xpose.msra.mxu0 0.0
        %970 = vmatprep.subr.mxu0 0.0
        %971 = vmatpush2.xpose.msra.mxu0 0.0
        %972 = vmatprep.subr.mxu0 0.0
        %973 = vmatpush2.xpose.msra.mxu0 0.0
        %974 = vmatprep.subr.mxu0 0.0
        %975 = vmatpush2.xpose.msra.mxu0 0.0
        %976 = vmatprep.subr.mxu0 0.0
        %977 = vmatpush2.xpose.msra.mxu0 0.0
        %978 = vmatprep.subr.mxu0 0.0
        %979 = vmatpush2.xpose.msra.mxu0 0.0
        %980 = vmatprep.subr.mxu0 0.0
        %981 = vmatpush2.xpose.msra.mxu0 0.0
        %982 = vmatprep.subr.mxu0 0.0
        %983 = vmatpush2.xpose.msra.mxu0 0.0
        %984 = vmatprep.subr.mxu0 0.0
        %985 = vmatpush2.xpose.msra.mxu0 0.0
        %986 = vmatprep.subr.mxu0 0.0
        %987 = vmatpush2.xpose.msra.mxu0 0.0
        %988 = vmatprep.subr.mxu0 0.0
        %989 = vmatpush2.xpose.msra.mxu0 0.0
        %990 = vmatprep.subr.mxu0 0.0
        %991 = vmatpush2.xpose.msra.mxu0 0.0
        %992 = vmatprep.subr.mxu0 0.0
        %993 = vmatpush2.xpose.msra.mxu0 0.0
        %994 = vmatprep.subr.mxu0 0.0
        %995 = vmatpush2.xpose.msra.mxu0 0.0
        %996 = vmatprep.subr.mxu0 0.0
        %997 = vmatpush2.xpose.msra.mxu0 0.0
        %998 = vmatprep.mubr.f32.mxu0 0.0
        %999 = vmatmul.mubr.f32.gmra.mxu0 %v933
        %v1000 = vpop.f32.mrf.mxu0
        %v1001 = vadd.f32 0.0, %v1000
        %v1002 = vpop.f32.mrf.mxu0
        %1003 = vdwg.mxu0
        %v1004 = vsel %vm639, %v1001, -inf
        %1005 = vmax.xlane.f32.xlu0 %v1004
        %v1006 = vpop.xlane.xlu0 %1005
        %v1007 = vsub.f32 %v1001, %v1006
        %v1008 = vmul.f32 %v1007, 1.442695
        %v1009 = vpow.pop %v1008
        %v1010 = vsel %vm639, %v1009, 0.0
        %1011 = vadd.xlane.f32.xlu0 %v1010
        %v1012 = vpop.xlane.xlu0 %1011
        %v1013 = vrcp.pop %v1012
        %v1014 = vmul.f32 %v1009, %v1013
        %v1016 = vsel %vm639, %v1014, 0
        %1018 = vmatprep.subr.mxu0 0.0
        %1019 = vmatpush1.msra.mxu0 0.0
        %1020 = vmatprep.subr.mxu0 0.0
        %1021 = vmatpush1.msra.mxu0 0.0
        %1022 = vmatprep.subr.mxu0 0.0
        %1023 = vmatpush1.msra.mxu0 0.0
        %1024 = vmatprep.subr.mxu0 0.0
        %1025 = vmatpush1.msra.mxu0 0.0
        %1026 = vmatprep.subr.mxu0 0.0
        %1027 = vmatpush1.msra.mxu0 0.0
        %1028 = vmatprep.subr.mxu0 0.0
        %1029 = vmatpush1.msra.mxu0 0.0
        %1030 = vmatprep.subr.mxu0 0.0
        %1031 = vmatpush1.msra.mxu0 0.0
        %1032 = vmatprep.subr.mxu0 0.0
        %1033 = vmatpush1.msra.mxu0 0.0
        %1034 = vmatprep.subr.mxu0 0.0
        %1035 = vmatpush1.msra.mxu0 0.0
        %1036 = vmatprep.subr.mxu0 0.0
        %1037 = vmatpush1.msra.mxu0 0.0
        %1038 = vmatprep.subr.mxu0 0.0
        %1039 = vmatpush1.msra.mxu0 0.0
        %1040 = vmatprep.subr.mxu0 0.0
        %1041 = vmatpush1.msra.mxu0 0.0
        %1042 = vmatprep.subr.mxu0 0.0
        %1043 = vmatpush1.msra.mxu0 0.0
        %1044 = vmatprep.subr.mxu0 0.0
        %1045 = vmatpush1.msra.mxu0 0.0
        %1046 = vmatprep.subr.mxu0 0.0
        %1047 = vmatpush1.msra.mxu0 %v458
        %1048 = vmatprep.subr.mxu0 0.0
        %1049 = vmatpush1.msra.mxu0 %v456
        %1050 = vmatprep.subr.mxu0 0.0
        %1051 = vmatpush2.msra.mxu0 0.0
        %1052 = vmatprep.subr.mxu0 0.0
        %1053 = vmatpush2.msra.mxu0 0.0
        %1054 = vmatprep.subr.mxu0 0.0
        %1055 = vmatpush2.msra.mxu0 0.0
        %1056 = vmatprep.subr.mxu0 0.0
        %1057 = vmatpush2.msra.mxu0 0.0
        %1058 = vmatprep.subr.mxu0 0.0
        %1059 = vmatpush2.msra.mxu0 0.0
        %1060 = vmatprep.subr.mxu0 0.0
        %1061 = vmatpush2.msra.mxu0 0.0
        %1062 = vmatprep.subr.mxu0 0.0
        %1063 = vmatpush2.msra.mxu0 0.0
        %1064 = vmatprep.subr.mxu0 0.0
        %1065 = vmatpush2.msra.mxu0 0.0
        %1066 = vmatprep.subr.mxu0 0.0
        %1067 = vmatpush2.msra.mxu0 0.0
        %1068 = vmatprep.subr.mxu0 0.0
        %1069 = vmatpush2.msra.mxu0 0.0
        %1070 = vmatprep.subr.mxu0 0.0
        %1071 = vmatpush2.msra.mxu0 0.0
        %1072 = vmatprep.subr.mxu0 0.0
        %1073 = vmatpush2.msra.mxu0 0.0
        %1074 = vmatprep.subr.mxu0 0.0
        %1075 = vmatpush2.msra.mxu0 0.0
        %1076 = vmatprep.subr.mxu0 0.0
        %1077 = vmatpush2.msra.mxu0 0.0
        %1078 = vmatprep.subr.mxu0 0.0
        %1079 = vmatpush2.msra.mxu0 0.0
        %1080 = vmatprep.subr.mxu0 0.0
        %1081 = vmatpush2.msra.mxu0 0.0
        %1082 = vmatprep.mubr.f32.mxu0 0.0
        %1083 = vmatmul.mubr.f32.gmra.mxu0 %v1016
        %v1084 = vpop.f32.mrf.mxu0
        %v1085 = vadd.f32 0.0, %v1084
        %v1086 = vpop.f32.mrf.mxu0
        %1087 = vdwg.mxu0
        %v1088 = vlaneseq
        %v1089 = vshrl.u32 %v1088, 7
        %v1090 = vsub.s32 0, %v1089
        %v1091 = vrot.slane %v858, %v1090
        %1092 = vmatprep.subr.mxu0 0.0
        %1093 = vmatpush1.msra.mxu0 %v857
        %1094 = vmatprep.subr.mxu0 0.0
        %1095 = vmatpush1.msra.mxu0 %v856
        %1096 = vmatprep.subr.mxu0 0.0
        %1097 = vmatpush1.msra.mxu0 %v855
        %1098 = vmatprep.subr.mxu0 0.0
        %1099 = vmatpush1.msra.mxu0 %v854
        %1100 = vmatprep.subr.mxu0 0.0
        %1101 = vmatpush1.msra.mxu0 %v853
        %1102 = vmatprep.subr.mxu0 0.0
        %1103 = vmatpush1.msra.mxu0 %v852
        %1104 = vmatprep.subr.mxu0 0.0
        %1105 = vmatpush1.msra.mxu0 %v851
        %1106 = vmatprep.subr.mxu0 0.0
        %1107 = vmatpush1.msra.mxu0 %v850
        %1108 = vmatprep.subr.mxu0 0.0
        %1109 = vmatpush1.msra.mxu0 %v849
        %1110 = vmatprep.subr.mxu0 0.0
        %1111 = vmatpush1.msra.mxu0 %v848
        %1112 = vmatprep.subr.mxu0 0.0
        %1113 = vmatpush1.msra.mxu0 %v847
        %1114 = vmatprep.subr.mxu0 0.0
        %1115 = vmatpush1.msra.mxu0 %v846
        %1116 = vmatprep.subr.mxu0 0.0
        %1117 = vmatpush1.msra.mxu0 %v845
        %1118 = vmatprep.subr.mxu0 0.0
        %1119 = vmatpush1.msra.mxu0 %v844
        %1120 = vmatprep.subr.mxu0 0.0
        %1121 = vmatpush1.msra.mxu0 %v843
        %1122 = vmatprep.subr.mxu0 0.0
        %1123 = vmatpush1.msra.mxu0 %v842
        %1124 = vmatprep.subr.mxu0 0.0
        %1125 = vmatpush2.msra.mxu0 0.0
        %1126 = vmatprep.subr.mxu0 0.0
        %1127 = vmatpush2.msra.mxu0 0.0
        %1128 = vmatprep.subr.mxu0 0.0
        %1129 = vmatpush2.msra.mxu0 0.0
        %1130 = vmatprep.subr.mxu0 0.0
        %1131 = vmatpush2.msra.mxu0 0.0
        %1132 = vmatprep.subr.mxu0 0.0
        %1133 = vmatpush2.msra.mxu0 0.0
        %1134 = vmatprep.subr.mxu0 0.0
        %1135 = vmatpush2.msra.mxu0 0.0
        %1136 = vmatprep.subr.mxu0 0.0
        %1137 = vmatpush2.msra.mxu0 0.0
        %1138 = vmatprep.subr.mxu0 0.0
        %1139 = vmatpush2.msra.mxu0 0.0
        %1140 = vmatprep.subr.mxu0 0.0
        %1141 = vmatpush2.msra.mxu0 0.0
        %1142 = vmatprep.subr.mxu0 0.0
        %1143 = vmatpush2.msra.mxu0 0.0
        %1144 = vmatprep.subr.mxu0 0.0
        %1145 = vmatpush2.msra.mxu0 0.0
        %1146 = vmatprep.subr.mxu0 0.0
        %1147 = vmatpush2.msra.mxu0 0.0
        %1148 = vmatprep.subr.mxu0 0.0
        %1149 = vmatpush2.msra.mxu0 0.0
        %1150 = vmatprep.subr.mxu0 0.0
        %1151 = vmatpush2.msra.mxu0 0.0
        %1152 = vmatprep.subr.mxu0 0.0
        %1153 = vmatpush2.msra.mxu0 0.0
        %1154 = vmatprep.subr.mxu0 0.0
        %1155 = vmatpush2.msra.mxu0 0.0
        %1156 = vmatprep.mubr.f32.mxu0 0.0
        %1157 = vmatmul.mubr.f32.gmra.mxu0 %v1085
        %v1158 = vpop.f32.mrf.mxu0
        %v1159 = vadd.f32 %v1091, %v1158
        %v1160 = vpop.f32.mrf.mxu0
        %1161 = vdwg.mxu0
        %v1162 = vadd.f32 %v822, %v1159
        %v1163 = vld [vmem:[%s5 + $0x1] sm:$0x1]
        %v1164 = vld [vmem:[%s6 + $0x1] sm:$0x1]
        %1165 = vadd.xlane.f32.xlu0 %v1162
        %v1166 = vpop.xlane.xlu0 %1165
        %v1167 = vmul.f32 %v1166, %v803
        %v1168 = vsub.f32 %v1162, %v1167
        %v1169 = vmul.f32 %v1168, %v1168
        %1170 = vadd.xlane.f32.xlu0 %v1169
        %v1171 = vpop.xlane.xlu0 %1170
        %v1172 = vmul.f32 %v1171, %v803
        %v1173 = vadd.f32 %v1172, 1e-05
        %v1174 = vrsqrt.pop %v1173
        %v1175 = vmul.f32 %v1168, %v1174
        %v1176 = vlaneseq
        %v1177 = vshrl.u32 %v1176, 7
        %v1178 = vsub.s32 0, %v1177
        %v1179 = vrot.slane %v1163, %v1178
        %v1180 = vmul.f32 %v1175, %v1179
        %v1181 = vlaneseq
        %v1182 = vshrl.u32 %v1181, 7
        %v1183 = vsub.s32 0, %v1182
        %v1184 = vrot.slane %v1164, %v1183
        %v1185 = vadd.f32 %v1180, %v1184
        %v1186 = vld [vmem:[%s7] sm:$0xff]
        %v1187 = vld [vmem:[%s7 + $0x8] sm:$0xff]
        %v1188 = vld [vmem:[%s7 + $0x10] sm:$0xff]
        %v1189 = vld [vmem:[%s7 + $0x18] sm:$0xff]
        %v1190 = vld [vmem:[%s7 + $0x20] sm:$0xff]
        %v1191 = vld [vmem:[%s7 + $0x28] sm:$0xff]
        %v1192 = vld [vmem:[%s7 + $0x30] sm:$0xff]
        %v1193 = vld [vmem:[%s7 + $0x38] sm:$0xff]
        %v1194 = vld [vmem:[%s7 + $0x40] sm:$0xff]
        %v1195 = vld [vmem:[%s7 + $0x48] sm:$0xff]
        %v1196 = vld [vmem:[%s7 + $0x50] sm:$0xff]
        %v1197 = vld [vmem:[%s7 + $0x58] sm:$0xff]
        %v1198 = vld [vmem:[%s7 + $0x60] sm:$0xff]
        %v1199 = vld [vmem:[%s7 + $0x68] sm:$0xff]
        %v1200 = vld [vmem:[%s7 + $0x70] sm:$0xff]
        %v1201 = vld [vmem:[%s7 + $0x78] sm:$0xff]
        %v1202 = vld [vmem:[%s7 + $0x80] sm:$0xff]
        %v1203 = vld [vmem:[%s7 + $0x88] sm:$0xff]
        %v1204 = vld [vmem:[%s7 + $0x90] sm:$0xff]
        %v1205 = vld [vmem:[%s7 + $0x98] sm:$0xff]
        %v1206 = vld [vmem:[%s7 + $0xa0] sm:$0xff]
        %v1207 = vld [vmem:[%s7 + $0xa8] sm:$0xff]
        %v1208 = vld [vmem:[%s7 + $0xb0] sm:$0xff]
        %v1209 = vld [vmem:[%s7 + $0xb8] sm:$0xff]
        %v1210 = vld [vmem:[%s7 + $0xc0] sm:$0xff]
        %v1211 = vld [vmem:[%s7 + $0xc8] sm:$0xff]
        %v1212 = vld [vmem:[%s7 + $0xd0] sm:$0xff]
        %v1213 = vld [vmem:[%s7 + $0xd8] sm:$0xff]
        %v1214 = vld [vmem:[%s7 + $0xe0] sm:$0xff]
        %v1215 = vld [vmem:[%s7 + $0xe8] sm:$0xff]
        %v1216 = vld [vmem:[%s7 + $0xf0] sm:$0xff]
        %v1217 = vld [vmem:[%s7 + $0xf8] sm:$0xff]
        %v1218 = vld [vmem:[%s8] sm:$0x3]
        %v1220 = vlaneseq
        %v1221 = vshrl.u32 %v1220, 7
        %v1222 = vsub.s32 0, %v1221
        %v1223 = vrot.slane %v1218, %v1222
        %v1224 = vlaneseq
        %v1225 = vshrl.u32 %v1224, 7
        %v1226 = vsub.s32 1, %v1225
        %v1227 = vrot.slane %v1218, %v1226
        %1230 = vmatprep.subr.mxu0 %v1217
        %1231 = vmatpush1.msra.mxu0 %v1216
        %1232 = vmatprep.subr.mxu0 %v1215
        %1233 = vmatpush1.msra.mxu0 %v1214
        %1234 = vmatprep.subr.mxu0 %v1213
        %1235 = vmatpush1.msra.mxu0 %v1212
        %1236 = vmatprep.subr.mxu0 %v1211
        %1237 = vmatpush1.msra.mxu0 %v1210
        %1238 = vmatprep.subr.mxu0 %v1209
        %1239 = vmatpush1.msra.mxu0 %v1208
        %1240 = vmatprep.subr.mxu0 %v1207
        %1241 = vmatpush1.msra.mxu0 %v1206
        %1242 = vmatprep.subr.mxu0 %v1205
        %1243 = vmatpush1.msra.mxu0 %v1204
        %1244 = vmatprep.subr.mxu0 %v1203
        %1245 = vmatpush1.msra.mxu0 %v1202
        %1246 = vmatprep.subr.mxu0 %v1201
        %1247 = vmatpush1.msra.mxu0 %v1200
        %1248 = vmatprep.subr.mxu0 %v1199
        %1249 = vmatpush1.msra.mxu0 %v1198
        %1250 = vmatprep.subr.mxu0 %v1197
        %1251 = vmatpush1.msra.mxu0 %v1196
        %1252 = vmatprep.subr.mxu0 %v1195
        %1253 = vmatpush1.msra.mxu0 %v1194
        %1254 = vmatprep.subr.mxu0 %v1193
        %1255 = vmatpush1.msra.mxu0 %v1192
        %1256 = vmatprep.subr.mxu0 %v1191
        %1257 = vmatpush1.msra.mxu0 %v1190
        %1258 = vmatprep.subr.mxu0 %v1189
        %1259 = vmatpush1.msra.mxu0 %v1188
        %1260 = vmatprep.subr.mxu0 %v1187
        %1261 = vmatpush1.msra.mxu0 %v1186
        %1262 = vmatprep.subr.mxu0 0.0
        %1263 = vmatpush2.msra.mxu0 0.0
        %1264 = vmatprep.subr.mxu0 0.0
        %1265 = vmatpush2.msra.mxu0 0.0
        %1266 = vmatprep.subr.mxu0 0.0
        %1267 = vmatpush2.msra.mxu0 0.0
        %1268 = vmatprep.subr.mxu0 0.0
        %1269 = vmatpush2.msra.mxu0 0.0
        %1270 = vmatprep.subr.mxu0 0.0
        %1271 = vmatpush2.msra.mxu0 0.0
        %1272 = vmatprep.subr.mxu0 0.0
        %1273 = vmatpush2.msra.mxu0 0.0
        %1274 = vmatprep.subr.mxu0 0.0
        %1275 = vmatpush2.msra.mxu0 0.0
        %1276 = vmatprep.subr.mxu0 0.0
        %1277 = vmatpush2.msra.mxu0 0.0
        %1278 = vmatprep.subr.mxu0 0.0
        %1279 = vmatpush2.msra.mxu0 0.0
        %1280 = vmatprep.subr.mxu0 0.0
        %1281 = vmatpush2.msra.mxu0 0.0
        %1282 = vmatprep.subr.mxu0 0.0
        %1283 = vmatpush2.msra.mxu0 0.0
        %1284 = vmatprep.subr.mxu0 0.0
        %1285 = vmatpush2.msra.mxu0 0.0
        %1286 = vmatprep.subr.mxu0 0.0
        %1287 = vmatpush2.msra.mxu0 0.0
        %1288 = vmatprep.subr.mxu0 0.0
        %1289 = vmatpush2.msra.mxu0 0.0
        %1290 = vmatprep.subr.mxu0 0.0
        %1291 = vmatpush2.msra.mxu0 0.0
        %1292 = vmatprep.subr.mxu0 0.0
        %1293 = vmatpush2.msra.mxu0 0.0
        %1294 = vmatprep.mubr.f32.mxu0 0.0
        %1295 = vmatmul.mubr.f32.gmra.mxu0 %v1185
        %v1296 = vpop.f32.mrf.mxu0
        %v1297 = vadd.f32 %v1223, %v1296
        %v1298 = vpop.f32.mrf.mxu0
        %v1299 = vadd.f32 %v1227, %v1298
        %1300 = vdwg.mxu0
        %v1301 = vmax.f32 %v1297, 0.0
        %v1302 = vmax.f32 %v1299, 0.0
        %v1303 = vld [vmem:[%s9] sm:$0xff]
        %v1304 = vld [vmem:[%s9 + $0x8] sm:$0xff]
        %v1305 = vld [vmem:[%s9 + $0x10] sm:$0xff]
        %v1306 = vld [vmem:[%s9 + $0x18] sm:$0xff]
        %v1307 = vld [vmem:[%s9 + $0x20] sm:$0xff]
        %v1308 = vld [vmem:[%s9 + $0x28] sm:$0xff]
        %v1309 = vld [vmem:[%s9 + $0x30] sm:$0xff]
        %v1310 = vld [vmem:[%s9 + $0x38] sm:$0xff]
        %v1311 = vld [vmem:[%s9 + $0x40] sm:$0xff]
        %v1312 = vld [vmem:[%s9 + $0x48] sm:$0xff]
        %v1313 = vld [vmem:[%s9 + $0x50] sm:$0xff]
        %v1314 = vld [vmem:[%s9 + $0x58] sm:$0xff]
        %v1315 = vld [vmem:[%s9 + $0x60] sm:$0xff]
        %v1316 = vld [vmem:[%s9 + $0x68] sm:$0xff]
        %v1317 = vld [vmem:[%s9 + $0x70] sm:$0xff]
        %v1318 = vld [vmem:[%s9 + $0x78] sm:$0xff]
        %v1319 = vld [vmem:[%s9 + $0x80] sm:$0xff]
        %v1320 = vld [vmem:[%s9 + $0x88] sm:$0xff]
        %v1321 = vld [vmem:[%s9 + $0x90] sm:$0xff]
        %v1322 = vld [vmem:[%s9 + $0x98] sm:$0xff]
        %v1323 = vld [vmem:[%s9 + $0xa0] sm:$0xff]
        %v1324 = vld [vmem:[%s9 + $0xa8] sm:$0xff]
        %v1325 = vld [vmem:[%s9 + $0xb0] sm:$0xff]
        %v1326 = vld [vmem:[%s9 + $0xb8] sm:$0xff]
        %v1327 = vld [vmem:[%s9 + $0xc0] sm:$0xff]
        %v1328 = vld [vmem:[%s9 + $0xc8] sm:$0xff]
        %v1329 = vld [vmem:[%s9 + $0xd0] sm:$0xff]
        %v1330 = vld [vmem:[%s9 + $0xd8] sm:$0xff]
        %v1331 = vld [vmem:[%s9 + $0xe0] sm:$0xff]
        %v1332 = vld [vmem:[%s9 + $0xe8] sm:$0xff]
        %v1333 = vld [vmem:[%s9 + $0xf0] sm:$0xff]
        %v1334 = vld [vmem:[%s9 + $0xf8] sm:$0xff]
        %v1335 = vld [vmem:[%s10] sm:$0x1]
        %v1337 = vlaneseq
        %v1338 = vshrl.u32 %v1337, 7
        %v1339 = vsub.s32 0, %v1338
        %v1340 = vrot.slane %v1335, %v1339
        %1342 = vmatprep.subr.mxu0 0.0
        %1343 = vmatpush1.msra.mxu0 %v1318
        %1344 = vmatprep.subr.mxu0 0.0
        %1345 = vmatpush1.msra.mxu0 %v1317
        %1346 = vmatprep.subr.mxu0 0.0
        %1347 = vmatpush1.msra.mxu0 %v1316
        %1348 = vmatprep.subr.mxu0 0.0
        %1349 = vmatpush1.msra.mxu0 %v1315
        %1350 = vmatprep.subr.mxu0 0.0
        %1351 = vmatpush1.msra.mxu0 %v1314
        %1352 = vmatprep.subr.mxu0 0.0
        %1353 = vmatpush1.msra.mxu0 %v1313
        %1354 = vmatprep.subr.mxu0 0.0
        %1355 = vmatpush1.msra.mxu0 %v1312
        %1356 = vmatprep.subr.mxu0 0.0
        %1357 = vmatpush1.msra.mxu0 %v1311
        %1358 = vmatprep.subr.mxu0 0.0
        %1359 = vmatpush1.msra.mxu0 %v1310
        %1360 = vmatprep.subr.mxu0 0.0
        %1361 = vmatpush1.msra.mxu0 %v1309
        %1362 = vmatprep.subr.mxu0 0.0
        %1363 = vmatpush1.msra.mxu0 %v1308
        %1364 = vmatprep.subr.mxu0 0.0
        %1365 = vmatpush1.msra.mxu0 %v1307
        %1366 = vmatprep.subr.mxu0 0.0
        %1367 = vmatpush1.msra.mxu0 %v1306
        %1368 = vmatprep.subr.mxu0 0.0
        %1369 = vmatpush1.msra.mxu0 %v1305
        %1370 = vmatprep.subr.mxu0 0.0
        %1371 = vmatpush1.msra.mxu0 %v1304
        %1372 = vmatprep.subr.mxu0 0.0
        %1373 = vmatpush1.msra.mxu0 %v1303
        %1374 = vmatprep.subr.mxu0 0.0
        %1375 = vmatpush2.msra.mxu0 %v1334
        %1376 = vmatprep.subr.mxu0 0.0
        %1377 = vmatpush2.msra.mxu0 %v1333
        %1378 = vmatprep.subr.mxu0 0.0
        %1379 = vmatpush2.msra.mxu0 %v1332
        %1380 = vmatprep.subr.mxu0 0.0
        %1381 = vmatpush2.msra.mxu0 %v1331
        %1382 = vmatprep.subr.mxu0 0.0
        %1383 = vmatpush2.msra.mxu0 %v1330
        %1384 = vmatprep.subr.mxu0 0.0
        %1385 = vmatpush2.msra.mxu0 %v1329
        %1386 = vmatprep.subr.mxu0 0.0
        %1387 = vmatpush2.msra.mxu0 %v1328
        %1388 = vmatprep.subr.mxu0 0.0
        %1389 = vmatpush2.msra.mxu0 %v1327
        %1390 = vmatprep.subr.mxu0 0.0
        %1391 = vmatpush2.msra.mxu0 %v1326
        %1392 = vmatprep.subr.mxu0 0.0
        %1393 = vmatpush2.msra.mxu0 %v1325
        %1394 = vmatprep.subr.mxu0 0.0
        %1395 = vmatpush2.msra.mxu0 %v1324
        %1396 = vmatprep.subr.mxu0 0.0
        %1397 = vmatpush2.msra.mxu0 %v1323
        %1398 = vmatprep.subr.mxu0 0.0
        %1399 = vmatpush2.msra.mxu0 %v1322
        %1400 = vmatprep.subr.mxu0 0.0
        %1401 = vmatpush2.msra.mxu0 %v1321
        %1402 = vmatprep.subr.mxu0 0.0
        %1403 = vmatpush2.msra.mxu0 %v1320
        %1404 = vmatprep.subr.mxu0 0.0
        %1405 = vmatpush2.msra.mxu0 %v1319
        %1406 = vmatprep.mubr.f32.mxu0 %v1302
        %1407 = vmatmul.mubr.f32.gmra.mxu0 %v1301
        %v1408 = vpop.f32.mrf.mxu0
        %v1409 = vadd.f32 %v1340, %v1408
        %v1410 = vpop.f32.mrf.mxu0
        %1411 = vdwg.mxu0
        %v1412 = vadd.f32 %v1185, %v1409
        %v1413 = vld [vmem:[%s5 + $0x2] sm:$0x1]
        %v1414 = vld [vmem:[%s6 + $0x2] sm:$0x1]
        %1415 = vadd.xlane.f32.xlu0 %v1412
        %v1416 = vpop.xlane.xlu0 %1415
        %v1417 = vmul.f32 %v1416, %v803
        %v1418 = vsub.f32 %v1412, %v1417
        %v1419 = vmul.f32 %v1418, %v1418
        %1420 = vadd.xlane.f32.xlu0 %v1419
        %v1421 = vpop.xlane.xlu0 %1420
        %v1422 = vmul.f32 %v1421, %v803
        %v1423 = vadd.f32 %v1422, 1e-05
        %v1424 = vrsqrt.pop %v1423
        %v1425 = vmul.f32 %v1418, %v1424
        %v1426 = vlaneseq
        %v1427 = vshrl.u32 %v1426, 7
        %v1428 = vsub.s32 0, %v1427
        %v1429 = vrot.slane %v1413, %v1428
        %v1430 = vmul.f32 %v1425, %v1429
        %v1431 = vlaneseq
        %v1432 = vshrl.u32 %v1431, 7
        %v1433 = vsub.s32 0, %v1432
        %v1434 = vrot.slane %v1414, %v1433
        %v1435 = vadd.f32 %v1430, %v1434
        %1436 = vst [vmem:[%s431] sm:$0xff] %v1435
        %s1437 = sand.u32 %s295, 1
        %s1438 = scalar_lea.sflag [#allocation3], %s1437
        %s1439 = sand.u32 %s295, 1
        %s1440 = smul.addr %s1439, 8
        %s1441 = scalar_lea.vmem [#allocation2], %s1440
        // Predicated region
        $region65: #{decoder_layer.1} parent=63 // pred_check
          %p1442 = pneg %p305
        $region66: #{decoder_layer.1} parent=63 // pred_check_branch
          %1444 = sbr.rel (%p1442) target = $region68
        $region67: #{decoder_layer.1} parent=63 // pred_region
          %s1446 = ssub.s32 128, 128
          %1447 = vsyncadd %s1438, %s1446
          %s1448 = smul.addr %s29, 2
          %s1449 = sadd.s32 %s30, %s1448
          %s1450 = smul.addr %s1449, 128
          %s1451 = scalar_lea.hbm %s11, %s1450
          %s1453 = sshll.u32 %s1441, 4
          %s1454 = int_to_ptr.vmem [resolvable:$true] %s1453
          %1456 = dma.vmem_to_hbm [thread:$0]  %s1454, 128, %s1451, %s1438
        $region68: #{decoder_layer.1} parent=63 // pred_fallthru
          _
      $region64: #{decoder_layer.1} parent=5 // pred_fallthru
        _
      %p1457 = scmp.le.s32.totalorder 2, %s20
      // Predicated region
      $region69: #{decoder_layer.1} parent=5 // pred_check
        %p1458 = pneg %p1457
      $region70: #{decoder_layer.1} parent=5 // pred_check_branch
        %1460 = sbr.rel (%p1458) target = $region72
      $region71: #{decoder_layer.1} parent=5 // pred_region
        %s1461 = ssub.s32 %s20, 2
        // Predicated region
        $region73: #{decoder_layer.1} parent=71 // pred_check
          %p1462 = pneg %p311
        $region74: #{decoder_layer.1} parent=71 // pred_check_branch
          %1464 = sbr.rel (%p1462) target = $region76
        $region75: #{decoder_layer.1} parent=71 // pred_region
          %s1465 = sand.u32 %s296, 1
          %s1466 = scalar_lea.sflag [#allocation3], %s1465
          %s1467 = sand.u32 %s296, 1
          %s1468 = smul.addr %s1467, 8
          %s1469 = scalar_lea.vmem [#allocation2], %s1468
          %1470 = dma.done %s1466, 128
        $region76: #{decoder_layer.1} parent=71 // pred_fallthru
          _
      $region72: #{decoder_layer.1} parent=5 // pred_fallthru
        _
    $region6: #{decoder_layer.1} parent=1 // loop_footer
      %s24 = sadd.s32 1, %s20
    $region7: #{decoder_layer.1} parent=1 // loop_footer_branch
      %19 = sbr.rel target = $region3
    $region8: #{decoder_layer.1} parent=1 // loop_exit
      _
    %1471 = vsyncpa [#allocation3], 1
    %s1472 = scalar_lea.sflag [#allocation3], 1
    %1473 = vsyncpa %s1472, 1

</llo_original>
